<compile_context>
chip_gen: v5e
topology: v5e:2x2
jax: 0.10.0
libtpu: 0.0.40
codegen_flags: <defaults>
</compile_context>

<pallas_src>
import functools
import math

import jax
import jax.numpy as jnp
from jax.experimental import pallas as pl
from jax.experimental.pallas import tpu as pltpu


_BF16 = jnp.bfloat16


# ----------------------------- in-kernel helpers ----------------------------

def _gelu(x):
    # tanh-approximate GELU (tanh goes to the EUP slot).
    c = 0.7978845608028654  # sqrt(2/pi)
    return 0.5 * x * (1.0 + jnp.tanh(c * (x + 0.044715 * x * x * x)))


def _layernorm(x, g, b):
    # x: (M, h); g/b: (1, h). torch default eps = 1e-5.
    mean = jnp.mean(x, axis=-1, keepdims=True)
    c = x - mean
    var = jnp.mean(c * c, axis=-1, keepdims=True)
    return c * jax.lax.rsqrt(var + 1e-5) * g + b


def _softmax_lastdim(s):
    m = jnp.max(s, axis=-1, keepdims=True)
    p = jnp.exp(s - m)
    return p * pl.reciprocal(jnp.sum(p, axis=-1, keepdims=True), approx=True)


def _mmb(a, b):
    # bf16 MXU matmul with f32 accumulation.
    return jnp.dot(a.astype(_BF16), b.astype(_BF16),
                   preferred_element_type=jnp.float32)


def _mha(q2d, k2d, v2d, scratch, batch, s_q, s_k, nhead, dh):
    """Multi-head attention on 2-D (rows, nhead*dh) Q/K/V (scale baked in Q).

    Per-head contexts are written into adjacent column slices of `scratch`
    so that a single fused output projection can be applied by the caller.
    Returns the concatenated head outputs, shape (batch*s_q, nhead*dh).
    """
    rows = batch * s_q
    for hd in range(nhead):
        q = q2d[:, hd * dh:(hd + 1) * dh].reshape(batch, s_q, dh)
        k = k2d[:, hd * dh:(hd + 1) * dh].reshape(batch, s_k, dh)
        v = v2d[:, hd * dh:(hd + 1) * dh].reshape(batch, s_k, dh)
        s = jnp.einsum('bqd,bkd->bqk', q.astype(_BF16), k.astype(_BF16),
                       preferred_element_type=jnp.float32)
        p = _softmax_lastdim(s)
        o = jnp.einsum('bqk,bkd->bqd', p.astype(_BF16), v.astype(_BF16),
                       preferred_element_type=jnp.float32)
        scratch[0:rows, hd * dh:(hd + 1) * dh] = o.reshape(rows, dh)
    return scratch[0:rows, :]


# ------------------------------- slab layout ---------------------------------

def _slab_layout(cfg):
    """Static row/column offsets of the three parameter slabs."""
    h = cfg["hidden"]
    ffn = 4 * h
    nc = cfg["n_classes"]
    kkc = cfg["patch_k"] ** 2 * cfg["cin"]
    pp = cfg["patch_dim"] ** 2
    t = cfg["num_preds"]

    # w_h slab: all (h, X) weight matrices, concatenated along columns.
    col_order = [
        ("enc_qkv", 3 * h), ("enc_out", h), ("enc_lin1", ffn),
        ("dec_sa", h), ("dec_caq", h), ("dec_cakv", 2 * h), ("dec_caout", h),
        ("dec_lin1", ffn),
        ("mlp0", h), ("mlp1", h), ("mlp2", h), ("mlp3", h),
        ("cls", nc), ("bb4", 4),
    ]
    # w_v slab: everything with h columns, concatenated along rows.
    row_order = [
        ("fe_w", kkc), ("pos", pp), ("query", t),
        ("enc_lin2", ffn), ("dec_lin2", ffn), ("xyxy", 4),
        ("fe_b", 1), ("enc_out_b", 1), ("enc_lin2_b", 1),
        ("enc_ln1_g", 1), ("enc_ln1_b", 1), ("enc_ln2_g", 1), ("enc_ln2_b", 1),
        ("enc_lnf_g", 1), ("enc_lnf_b", 1),
        ("dec_sa_b", 1), ("dec_caq_b", 1), ("dec_caout_b", 1), ("dec_lin2_b", 1),
        ("dec_ln1_g", 1), ("dec_ln1_b", 1), ("dec_ln2_g", 1), ("dec_ln2_b", 1),
        ("dec_ln3_g", 1), ("dec_ln3_b", 1), ("dec_lnf_g", 1), ("dec_lnf_b", 1),
        ("mlp0_b", 1), ("mlp1_b", 1), ("mlp2_b", 1), ("mlp3_b", 1),
    ]
    # b_misc slab: biases whose width is not h, one padded row each.
    misc_order = [
        ("enc_qkv_b", 3 * h), ("enc_lin1_b", ffn), ("dec_cakv_b", 2 * h),
        ("dec_lin1_b", ffn), ("cls_b", nc), ("bb4_b", 4),
    ]

    def offsets(order):
        d, off = {}, 0
        for name, sz in order:
            d[name] = (off, off + sz)
            off += sz
        return d, off

    cols, wh_cols = offsets(col_order)
    rows, wv_rows = offsets(row_order)
    misc = {name: (i, sz) for i, (name, sz) in enumerate(misc_order)}
    misc_width = max(sz for _, sz in misc_order)
    return dict(col_order=col_order, cols=cols, wh_cols=wh_cols,
                row_order=row_order, rows=rows, wv_rows=wv_rows,
                misc_order=misc_order, misc=misc,
                misc_rows=len(misc_order), misc_width=misc_width)


# ------------------------------- fused kernel --------------------------------

def _detr_kernel(patches_ref, wh_ref, wv_ref, mb_ref, out_ref, attn_scratch, *,
                 batch, nhead, hidden, patch_dim, num_preds, n_classes, lo,
                 out_width):
    h = hidden
    dh = h // nhead
    pp = patch_dim * patch_dim
    seq = pp                       # encoder sequence length
    t = num_preds
    m = batch * pp
    mt = batch * t
    nc = n_classes
    cols, rows, misc = lo["cols"], lo["rows"], lo["misc"]

    def wcol(name):
        a, b = cols[name]
        return wh_ref[:, a:b]

    def wrow(name):
        a, b = rows[name]
        return wv_ref[a:b, :]

    def mrow(name):
        r, w = misc[name]
        return mb_ref[r:r + 1, :w]

    # ---------------- frontend: folded patchify+proj (+/255), pos add -------
    x = _mmb(patches_ref[...], wrow("fe_w")) + wrow("fe_b")            # (m, h)
    pos = wrow("pos")                                                  # (pp, h)
    x = (x.reshape(batch, pp, h) + pos[None, :, :]).reshape(m, h)

    # ---------------- encoder layer (post-norm) + final encoder LN ----------
    qkv = _mmb(x, wcol("enc_qkv")) + mrow("enc_qkv_b")                 # (m, 3h)
    attn = _mha(qkv[:, 0:h], qkv[:, h:2 * h], qkv[:, 2 * h:3 * h],
                attn_scratch, batch, seq, seq, nhead, dh)
    attn = _mmb(attn, wcol("enc_out")) + wrow("enc_out_b")             # fused out-proj
    x = _layernorm(x + attn, wrow("enc_ln1_g"), wrow("enc_ln1_b"))
    ff = _gelu(_mmb(x, wcol("enc_lin1")) + mrow("enc_lin1_b"))
    ff = _mmb(ff, wrow("enc_lin2")) + wrow("enc_lin2_b")
    x = _layernorm(x + ff, wrow("enc_ln2_g"), wrow("enc_ln2_b"))
    mem = _layernorm(x, wrow("enc_lnf_g"), wrow("enc_lnf_b"))          # (m, h)

    # ---------------- decoder layer + final decoder LN ----------------------
    tq = wrow("query")                                                 # (t, h)
    tg = jnp.broadcast_to(tq[None, :, :], (batch, t, h)).reshape(mt, h)
    # Self-attention with a single query/key: softmax is the identity, so the
    # whole block collapses to one folded (h, h) matmul (prepared offline).
    sa = _mmb(tg, wcol("dec_sa")) + wrow("dec_sa_b")
    tg = _layernorm(tg + sa, wrow("dec_ln1_g"), wrow("dec_ln1_b"))
    # Cross attention: queries from tgt, keys/values from encoder memory.
    qc = _mmb(tg, wcol("dec_caq")) + wrow("dec_caq_b")                 # (mt, h)
    kv = _mmb(mem, wcol("dec_cakv")) + mrow("dec_cakv_b")              # (m, 2h)
    ca = _mha(qc, kv[:, 0:h], kv[:, h:2 * h],
              attn_scratch, batch, t, seq, nhead, dh)
    ca = _mmb(ca, wcol("dec_caout")) + wrow("dec_caout_b")
    tg = _layernorm(tg + ca, wrow("dec_ln2_g"), wrow("dec_ln2_b"))
    ff = _gelu(_mmb(tg, wcol("dec_lin1")) + mrow("dec_lin1_b"))
    ff = _mmb(ff, wrow("dec_lin2")) + wrow("dec_lin2_b")
    tg = _layernorm(tg + ff, wrow("dec_ln3_g"), wrow("dec_ln3_b"))
    tg = _layernorm(tg, wrow("dec_lnf_g"), wrow("dec_lnf_b"))

    # ---------------- heads -------------------------------------------------
    logits = _mmb(tg, wcol("cls")) + mrow("cls_b")                     # (mt, nc)
    hd_act = tg
    for i in range(4):
        hd_act = _gelu(_mmb(hd_act, wcol(f"mlp{i}")) + wrow(f"mlp{i}_b"))
    bb = jax.nn.sigmoid(_mmb(hd_act, wcol("bb4")) + mrow("bb4_b"))     # (mt, 4)
    xa, xb = rows["xyxy"]
    xyxy_m = wv_ref[xa:xb, 0:4]                                        # (4, 4)
    # xyhw -> xyxy as a constant 4x4 linear map (avoids per-lane gathers).
    bbx = jnp.dot(bb, xyxy_m, preferred_element_type=jnp.float32)      # (mt, 4)

    # Single packed, lane-dense output slab; split in the JAX wrapper.
    out_ref[...] = jnp.zeros((mt, out_width), jnp.float32)
    out_ref[:, 0:nc] = logits
    out_ref[:, nc:nc + 4] = bb
    out_ref[:, nc + 4:nc + 8] = bbx


# ------------------------------ pallas wrapper --------------------------------

def _full_spec(shape):
    n = len(shape)
    return pl.BlockSpec(shape, lambda *_: (0,) * n)


def detr_forward(prep, inputs_u8, cfg):
    h = cfg["hidden"]
    K = cfg["patch_k"]
    P = cfg["patch_dim"]
    C = cfg["cin"]
    nc = cfg["n_classes"]
    B, H, W, _ = inputs_u8.shape
    Hp, Wp = H // K, W // K                                            # == P, P

    # /255 is folded into the frontend weights; stay channels-last throughout.
    x = inputs_u8.astype(jnp.float32)                                  # (B, H, W, C)
    # Patch rows ordered (b, wp, hp) to match torch's swapaxes(3,1)+flatten(2).
    patches = (x.reshape(B, Hp, K, Wp, K, C)
                 .transpose(0, 3, 1, 2, 4, 5)
                 .reshape(B * Wp * Hp, K * K * C))

    lo = _slab_layout(cfg)
    mt = B * cfg["num_preds"]
    out_width = ((nc + 8 + 127) // 128) * 128                          # lane-dense

    kernel = functools.partial(
        _detr_kernel, batch=B, nhead=cfg["nhead"], hidden=h, patch_dim=P,
        num_preds=cfg["num_preds"], n_classes=nc, lo=lo, out_width=out_width)

    args = (patches, prep["w_h"], prep["w_v"], prep["b_misc"])
    packed = pl.pallas_call(
        kernel,
        out_shape=jax.ShapeDtypeStruct((mt, out_width), jnp.float32),
        grid=(1,),
        in_specs=[_full_spec(a.shape) for a in args],
        out_specs=_full_spec((mt, out_width)),
        scratch_shapes=[pltpu.VMEM((B * P * P, h), jnp.float32)],
        compiler_params=pltpu.CompilerParams(
            dimension_semantics=("arbitrary",)),
    )(*args)

    return {"obj": packed[:, :nc],
            "bb_xyhw": packed[:, nc:nc + 4],
            "bb_xyxy": packed[:, nc + 4:nc + 8]}


# ----------------------------- param preparation ------------------------------

def prepare_params(params, cfg):
    """One-time re-layout of torch-style params into three kernel-ready slabs."""
    h = cfg["hidden"]
    ffn = 4 * h
    K = cfg["patch_k"]
    C = cfg["cin"]
    cb = cfg["cb"]
    P = cfg["patch_dim"]
    nhead = cfg["nhead"]
    dh = h // nhead
    scale = 1.0 / math.sqrt(dh)
    lo = _slab_layout(cfg)

    assert cfg["num_preds"] == 1  # TODO(synk): T>1 needs a real decoder self-attn.

    enc, dec = params["enc"], params["dec"]

    # Encoder self-attention: fused QKV with 1/sqrt(dh) baked into Q.
    wq, wk, wv = jnp.split(enc["self_attn"]["in_w"], 3, axis=0)
    bq, bk, bv = jnp.split(enc["self_attn"]["in_b"], 3)
    enc_qkv_w = jnp.concatenate([wq * scale, wk, wv], axis=0).T        # (h, 3h)
    enc_qkv_b = jnp.concatenate([bq * scale, bk, bv])

    # Decoder self-attention (num_preds == 1): fold Wv @ Wout into one matrix.
    _, _, dwv = jnp.split(dec["self_attn"]["in_w"], 3, axis=0)
    _, _, dbv = jnp.split(dec["self_attn"]["in_b"], 3)
    wo = dec["self_attn"]["out_w"]
    sa_w = dwv.T @ wo.T                                                # (h, h)
    sa_b = dbv @ wo.T + dec["self_attn"]["out_b"]

    # Decoder cross-attention (scale baked into Q).
    cwq, cwk, cwv = jnp.split(dec["cross_attn"]["in_w"], 3, axis=0)
    cbq, cbk, cbv = jnp.split(dec["cross_attn"]["in_b"], 3)
    caq_w = (cwq * scale).T
    caq_b = cbq * scale
    cakv_w = jnp.concatenate([cwk, cwv], axis=0).T                     # (h, 2h)
    cakv_b = jnp.concatenate([cbk, cbv])

    # Frontend: fold /255 + patchify-conv stand-in + 1x1 proj into one matmul.
    bb_w = params["backbone_w"].transpose(2, 3, 1, 0).reshape(K * K * C, cb) / 255.0
    proj_w = params["proj_w"].reshape(h, cb).T                         # (cb, h)
    fe_w = bb_w @ proj_w                                               # (K*K*C, h)
    fe_b = params["backbone_b"] @ proj_w + params["proj_b"]            # (h,)

    # 2-D positional encoding flattened channels-last, rows ordered (wp, hp).
    pos_h = jnp.broadcast_to(params["pe_h"][:, None, :], (h // 2, P, P))
    pos_w = jnp.broadcast_to(params["pe_w"][:, :, None], (h // 2, P, P))
    pos = jnp.concatenate([pos_h, pos_w], axis=0).transpose(1, 2, 0).reshape(P * P, h)

    # xyhw -> xyxy constant 4x4 linear map, padded to h columns for the slab.
    xyxy = jnp.array([[1.0, 0.0, 1.0, 0.0],
                      [0.0, 1.0, 0.0, 1.0],
                      [-0.5, 0.0, 0.5, 0.0],
                      [0.0, -0.5, 0.0, 0.5]], jnp.float32)
    xyxy = jnp.pad(xyxy, ((0, 0), (0, h - 4)))

    colmats = {
        "enc_qkv": enc_qkv_w,
        "enc_out": enc["self_attn"]["out_w"].T,
        "enc_lin1": enc["lin1_w"].T,
        "dec_sa": sa_w,
        "dec_caq": caq_w,
        "dec_cakv": cakv_w,
        "dec_caout": dec["cross_attn"]["out_w"].T,
        "dec_lin1": dec["lin1_w"].T,
        "mlp0": params["bb0_w"].T, "mlp1": params["bb1_w"].T,
        "mlp2": params["bb2_w"].T, "mlp3": params["bb3_w"].T,
        "cls": params["cls_w"].T,
        "bb4": params["bb4_w"].T,
    }
    rowmats = {
        "fe_w": fe_w, "pos": pos,
        "query": params["query_pos"].reshape(cfg["num_preds"], h),
        "enc_lin2": enc["lin2_w"].T, "dec_lin2": dec["lin2_w"].T,
        "xyxy": xyxy,
        "fe_b": fe_b.reshape(1, h),
        "enc_out_b": enc["self_attn"]["out_b"].reshape(1, h),
        "enc_lin2_b": enc["lin2_b"].reshape(1, h),
        "enc_ln1_g": enc["norm1_g"].reshape(1, h),
        "enc_ln1_b": enc["norm1_b"].reshape(1, h),
        "enc_ln2_g": enc["norm2_g"].reshape(1, h),
        "enc_ln2_b": enc["norm2_b"].reshape(1, h),
        "enc_lnf_g": params["enc_norm_g"].reshape(1, h),
        "enc_lnf_b": params["enc_norm_b"].reshape(1, h),
        "dec_sa_b": sa_b.reshape(1, h),
        "dec_caq_b": caq_b.reshape(1, h),
        "dec_caout_b": dec["cross_attn"]["out_b"].reshape(1, h),
        "dec_lin2_b": dec["lin2_b"].reshape(1, h),
        "dec_ln1_g": dec["norm1_g"].reshape(1, h),
        "dec_ln1_b": dec["norm1_b"].reshape(1, h),
        "dec_ln2_g": dec["norm2_g"].reshape(1, h),
        "dec_ln2_b": dec["norm2_b"].reshape(1, h),
        "dec_ln3_g": dec["norm3_g"].reshape(1, h),
        "dec_ln3_b": dec["norm3_b"].reshape(1, h),
        "dec_lnf_g": params["dec_norm_g"].reshape(1, h),
        "dec_lnf_b": params["dec_norm_b"].reshape(1, h),
        "mlp0_b": params["bb0_b"].reshape(1, h),
        "mlp1_b": params["bb1_b"].reshape(1, h),
        "mlp2_b": params["bb2_b"].reshape(1, h),
        "mlp3_b": params["bb3_b"].reshape(1, h),
    }
    miscvecs = {
        "enc_qkv_b": enc_qkv_b,
        "enc_lin1_b": enc["lin1_b"],
        "dec_cakv_b": cakv_b,
        "dec_lin1_b": dec["lin1_b"],
        "cls_b": params["cls_b"],
        "bb4_b": params["bb4_b"],
    }

    for name, sz in lo["col_order"]:
        assert colmats[name].shape == (h, sz), (name, colmats[name].shape)
    for name, sz in lo["row_order"]:
        assert rowmats[name].shape == (sz, h), (name, rowmats[name].shape)

    w_h = jnp.concatenate([colmats[n] for n, _ in lo["col_order"]], axis=1)
    w_v = jnp.concatenate([rowmats[n] for n, _ in lo["row_order"]], axis=0)
    b_misc = jnp.stack(
        [jnp.pad(miscvecs[n], (0, lo["misc_width"] - miscvecs[n].shape[0]))
         for n, _ in lo["misc_order"]], axis=0)

    return {"w_h": w_h, "w_v": w_v, "b_misc": b_misc}


# --------------------------------- param init ---------------------------------

def init_params(key, cfg):
    h = cfg["hidden"]
    cb = cfg["cb"]
    P = cfg["patch_dim"]
    K = cfg["patch_k"]
    nc = cfg["n_classes"]
    ffn = 4 * h
    keys = iter(jax.random.split(key, 64))

    def w(shape, scale=0.05):
        return scale * jax.random.normal(next(keys), shape, jnp.float32)

    def zeros(n):
        return jnp.zeros((n,), jnp.float32)

    def ones(n):
        return jnp.ones((n,), jnp.float32)

    def attn_p():
        return {"in_w": w((3 * h, h)), "in_b": zeros(3 * h),
                "out_w": w((h, h)), "out_b": zeros(h)}

    return {
        "backbone_w": w((cb, cfg["cin"], K, K)),
        "backbone_b": zeros(cb),
        "proj_w": w((h, cb, 1, 1)),
        "proj_b": zeros(h),
        "pe_h": w((h // 2, P), 1.0),
        "pe_w": w((h // 2, P), 1.0),
        "query_pos": w((1, cfg["num_preds"], h), 1.0),
        "enc": {
            "self_attn": attn_p(),
            "lin1_w": w((ffn, h)), "lin1_b": zeros(ffn),
            "lin2_w": w((h, ffn)), "lin2_b": zeros(h),
            "norm1_g": ones(h), "norm1_b": zeros(h),
            "norm2_g": ones(h), "norm2_b": zeros(h),
        },
        "enc_norm_g": ones(h), "enc_norm_b": zeros(h),
        "dec": {
            "self_attn": attn_p(),
            "cross_attn": attn_p(),
            "lin1_w": w((ffn, h)), "lin1_b": zeros(ffn),
            "lin2_w": w((h, ffn)), "lin2_b": zeros(h),
            "norm1_g": ones(h), "norm1_b": zeros(h),
            "norm2_g": ones(h), "norm2_b": zeros(h),
            "norm3_g": ones(h), "norm3_b": zeros(h),
        },
        "dec_norm_g": ones(h), "dec_norm_b": zeros(h),
        "cls_w": w((nc, h)), "cls_b": zeros(nc),
        "bb0_w": w((h, h)), "bb0_b": zeros(h),
        "bb1_w": w((h, h)), "bb1_b": zeros(h),
        "bb2_w": w((h, h)), "bb2_b": zeros(h),
        "bb3_w": w((h, h)), "bb3_b": zeros(h),
        "bb4_w": w((4, h)), "bb4_b": zeros(4),
    }


# ------------------------------------ main ------------------------------------

if __name__ == "__main__":
    # PATCH_DIM=4, hidden_dim=32 (=> nhead = 32//16 = 2), N_CLASSES=2,
    # num_preds=1, input image 16x16x3 (stride-4 patchify stand-in).
    cfg = dict(patch_dim=4, patch_k=4, cin=3, cb=32, hidden=32,
               nhead=2, num_preds=1, n_classes=2)

    key = jax.random.PRNGKey(0)
    kp, kx = jax.random.split(key)
    params = init_params(kp, cfg)

    B = 2
    img_hw = cfg["patch_dim"] * cfg["patch_k"]  # 16
    inputs = jax.random.randint(
        kx, (B, img_hw, img_hw, cfg["cin"]), 0, 256, dtype=jnp.int32
    ).astype(jnp.uint8)

    # One-time parameter re-layout into three kernel-ready slabs.
    prep = prepare_params(params, cfg)

    fwd = jax.jit(lambda pp, x: detr_forward(pp, x, cfg))
    out = fwd(prep, inputs)
    jax.block_until_ready(out)

    assert out["obj"].shape == (B, cfg["n_classes"])
    assert out["bb_xyhw"].shape == (B, 4)
    assert out["bb_xyxy"].shape == (B, 4)
    assert all(bool(jnp.isfinite(v).all()) for v in out.values())

    print("KERNEL_OK")
</pallas_src>

<mosaic_0001>
module attributes {stable_mosaic.version = 11 : i64} {
  func.func @_detr_kernel(%arg0: i32, %arg1: memref<32x48xf32, #tpu.memory_space<vmem>>, %arg2: memref<32x678xf32, #tpu.memory_space<vmem>>, %arg3: memref<350x32xf32, #tpu.memory_space<vmem>>, %arg4: memref<6x128xf32, #tpu.memory_space<vmem>>, %arg5: memref<2x128xf32, #tpu.memory_space<vmem>>, %arg6: memref<32x32xf32, #tpu.memory_space<vmem>>) attributes {dimension_semantics = [#tpu.dimension_semantics<arbitrary>], iteration_bounds = array<i64: 1>, scalar_prefetch = 0 : i64, scratch_operands = 1 : i64, tpu.core_type = #tpu.core_type<tc>, window_params = [{pipeline_mode = #tpu.pipeline_mode<synchronous>, transform_indices = @transform_0, window_bounds = array<i64: 32, 48>}, {pipeline_mode = #tpu.pipeline_mode<synchronous>, transform_indices = @transform_1, window_bounds = array<i64: 32, 678>}, {pipeline_mode = #tpu.pipeline_mode<synchronous>, transform_indices = @transform_2, window_bounds = array<i64: 350, 32>}, {pipeline_mode = #tpu.pipeline_mode<synchronous>, transform_indices = @transform_3, window_bounds = array<i64: 6, 128>}, {pipeline_mode = #tpu.pipeline_mode<synchronous>, transform_indices = @transform_4, window_bounds = array<i64: 2, 128>}]} {
    %c0 = arith.constant 0 : index
    %c0_0 = arith.constant 0 : index
    %0 = vector.load %arg1[%c0, %c0_0] : memref<32x48xf32, #tpu.memory_space<vmem>>, vector<32x48xf32>
    %c0_1 = arith.constant 0 : index
    %c0_2 = arith.constant 0 : index
    %1 = vector.load %arg3[%c0_1, %c0_2] : memref<350x32xf32, #tpu.memory_space<vmem>>, vector<48x32xf32>
    %2 = arith.truncf %0 : vector<32x48xf32> to vector<32x48xbf16>
    %3 = arith.truncf %1 : vector<48x32xf32> to vector<48x32xbf16>
    %cst = arith.constant dense<0.000000e+00> : vector<32x32xf32>
    %4 = tpu.matmul %2, %3, %cst {dimension_numbers = #tpu.dot_dimension_numbers<[1], [0], [0], [1], [0, 0, 1, 1], [], []>} : vector<32x48xbf16>, vector<48x32xbf16>, vector<32x32xf32> -> vector<32x32xf32>
    %c325 = arith.constant 325 : index
    %c0_3 = arith.constant 0 : index
    %5 = vector.load %arg3[%c325, %c0_3] : memref<350x32xf32, #tpu.memory_space<vmem>>, vector<1x32xf32>
    %6 = vector.broadcast %5 : vector<1x32xf32> to vector<32x32xf32>
    %7 = arith.addf %4, %6 : vector<32x32xf32>
    %c48 = arith.constant 48 : index
    %c0_4 = arith.constant 0 : index
    %8 = vector.load %arg3[%c48, %c0_4] : memref<350x32xf32, #tpu.memory_space<vmem>>, vector<16x32xf32>
    %9 = vector.shape_cast %7 : vector<32x32xf32> to vector<2x16x32xf32>
    %10 = vector.shape_cast %8 : vector<16x32xf32> to vector<1x16x32xf32>
    %11 = vector.broadcast %10 : vector<1x16x32xf32> to vector<2x16x32xf32>
    %12 = arith.addf %9, %11 : vector<2x16x32xf32>
    %13 = vector.shape_cast %12 : vector<2x16x32xf32> to vector<32x32xf32>
    %c0_5 = arith.constant 0 : index
    %c0_6 = arith.constant 0 : index
    %14 = vector.load %arg2[%c0_5, %c0_6] : memref<32x678xf32, #tpu.memory_space<vmem>>, vector<32x96xf32>
    %15 = arith.truncf %13 : vector<32x32xf32> to vector<32x32xbf16>
    %16 = arith.truncf %14 : vector<32x96xf32> to vector<32x96xbf16>
    %cst_7 = arith.constant dense<0.000000e+00> : vector<32x96xf32>
    %17 = tpu.matmul %15, %16, %cst_7 {dimension_numbers = #tpu.dot_dimension_numbers<[1], [0], [0], [1], [0, 0, 1, 1], [], []>} : vector<32x32xbf16>, vector<32x96xbf16>, vector<32x96xf32> -> vector<32x96xf32>
    %c0_8 = arith.constant 0 : index
    %c0_9 = arith.constant 0 : index
    %18 = vector.load %arg4[%c0_8, %c0_9] : memref<6x128xf32, #tpu.memory_space<vmem>>, vector<1x96xf32>
    %19 = vector.broadcast %18 : vector<1x96xf32> to vector<32x96xf32>
    %20 = arith.addf %17, %19 : vector<32x96xf32>
    %21 = vector.extract_strided_slice %20 {offsets = [0, 0], sizes = [32, 32], strides = [1, 1]} : vector<32x96xf32> to vector<32x32xf32>
    %22 = vector.extract_strided_slice %20 {offsets = [0, 32], sizes = [32, 32], strides = [1, 1]} : vector<32x96xf32> to vector<32x32xf32>
    %23 = vector.extract_strided_slice %20 {offsets = [0, 64], sizes = [32, 32], strides = [1, 1]} : vector<32x96xf32> to vector<32x32xf32>
    %24 = vector.extract_strided_slice %21 {offsets = [0, 0], sizes = [32, 16], strides = [1, 1]} : vector<32x32xf32> to vector<32x16xf32>
    %25 = vector.shape_cast %24 : vector<32x16xf32> to vector<2x16x16xf32>
    %26 = vector.extract_strided_slice %22 {offsets = [0, 0], sizes = [32, 16], strides = [1, 1]} : vector<32x32xf32> to vector<32x16xf32>
    %27 = vector.shape_cast %26 : vector<32x16xf32> to vector<2x16x16xf32>
    %28 = vector.extract_strided_slice %23 {offsets = [0, 0], sizes = [32, 16], strides = [1, 1]} : vector<32x32xf32> to vector<32x16xf32>
    %29 = vector.shape_cast %28 : vector<32x16xf32> to vector<2x16x16xf32>
    %30 = arith.truncf %25 : vector<2x16x16xf32> to vector<2x16x16xbf16>
    %31 = arith.truncf %27 : vector<2x16x16xf32> to vector<2x16x16xbf16>
    "tpu.trace_start"() <{level = 10 : i32, message = "bqd,bkd->bqk"}> : () -> ()
    %cst_10 = arith.constant dense<0.000000e+00> : vector<2x16x16xf32>
    %32 = tpu.matmul %30, %31, %cst_10 {dimension_numbers = #tpu.dot_dimension_numbers<[2], [2], [1], [1], [0, 0, 0, 1, 1, 1], [0], [0]>} : vector<2x16x16xbf16>, vector<2x16x16xbf16>, vector<2x16x16xf32> -> vector<2x16x16xf32>
    "tpu.trace_stop"() : () -> ()
    %cst_11 = arith.constant dense<0xFF800000> : vector<2x16xf32>
    %33 = vector.multi_reduction <maximumf>, %32, %cst_11 [2] : vector<2x16x16xf32> to vector<2x16xf32>
    %34 = vector.shape_cast %33 : vector<2x16xf32> to vector<2x16x1xf32>
    %35 = vector.broadcast %34 : vector<2x16x1xf32> to vector<2x16x16xf32>
    %36 = arith.subf %32, %35 : vector<2x16x16xf32>
    %37 = math.exp %36 : vector<2x16x16xf32>
    %cst_12 = arith.constant dense<0.000000e+00> : vector<2x16xf32>
    %38 = vector.multi_reduction <add>, %37, %cst_12 [2] : vector<2x16x16xf32> to vector<2x16xf32>
    %39 = vector.shape_cast %38 : vector<2x16xf32> to vector<2x16x1xf32>
    %40 = tpu.reciprocal %39 {approx = true} : vector<2x16x1xf32> -> vector<2x16x1xf32>
    %41 = vector.broadcast %40 : vector<2x16x1xf32> to vector<2x16x16xf32>
    %42 = arith.mulf %37, %41 : vector<2x16x16xf32>
    %43 = arith.truncf %42 : vector<2x16x16xf32> to vector<2x16x16xbf16>
    %44 = arith.truncf %29 : vector<2x16x16xf32> to vector<2x16x16xbf16>
    "tpu.trace_start"() <{level = 10 : i32, message = "bqk,bkd->bqd"}> : () -> ()
    %cst_13 = arith.constant dense<0.000000e+00> : vector<2x16x16xf32>
    %45 = tpu.matmul %43, %44, %cst_13 {dimension_numbers = #tpu.dot_dimension_numbers<[2], [1], [1], [2], [0, 0, 0, 1, 1, 2], [0], [0]>} : vector<2x16x16xbf16>, vector<2x16x16xbf16>, vector<2x16x16xf32> -> vector<2x16x16xf32>
    "tpu.trace_stop"() : () -> ()
    %46 = vector.shape_cast %45 : vector<2x16x16xf32> to vector<32x16xf32>
    %c0_14 = arith.constant 0 : index
    %c0_15 = arith.constant 0 : index
    %47 = vector.load %arg6[%c0_14, %c0_15] : memref<32x32xf32, #tpu.memory_space<vmem>>, vector<32x16xf32>
    tpu.vector_store %arg6[%c0_14, %c0_15], %46 {strides = array<i32>} : memref<32x32xf32, #tpu.memory_space<vmem>>, vector<32x16xf32>,
    %48 = vector.extract_strided_slice %21 {offsets = [0, 16], sizes = [32, 16], strides = [1, 1]} : vector<32x32xf32> to vector<32x16xf32>
    %49 = vector.shape_cast %48 : vector<32x16xf32> to vector<2x16x16xf32>
    %50 = vector.extract_strided_slice %22 {offsets = [0, 16], sizes = [32, 16], strides = [1, 1]} : vector<32x32xf32> to vector<32x16xf32>
    %51 = vector.shape_cast %50 : vector<32x16xf32> to vector<2x16x16xf32>
    %52 = vector.extract_strided_slice %23 {offsets = [0, 16], sizes = [32, 16], strides = [1, 1]} : vector<32x32xf32> to vector<32x16xf32>
    %53 = vector.shape_cast %52 : vector<32x16xf32> to vector<2x16x16xf32>
    %54 = arith.truncf %49 : vector<2x16x16xf32> to vector<2x16x16xbf16>
    %55 = arith.truncf %51 : vector<2x16x16xf32> to vector<2x16x16xbf16>
    "tpu.trace_start"() <{level = 10 : i32, message = "bqd,bkd->bqk"}> : () -> ()
    %cst_16 = arith.constant dense<0.000000e+00> : vector<2x16x16xf32>
    %56 = tpu.matmul %54, %55, %cst_16 {dimension_numbers = #tpu.dot_dimension_numbers<[2], [2], [1], [1], [0, 0, 0, 1, 1, 1], [0], [0]>} : vector<2x16x16xbf16>, vector<2x16x16xbf16>, vector<2x16x16xf32> -> vector<2x16x16xf32>
    "tpu.trace_stop"() : () -> ()
    %cst_17 = arith.constant dense<0xFF800000> : vector<2x16xf32>
    %57 = vector.multi_reduction <maximumf>, %56, %cst_17 [2] : vector<2x16x16xf32> to vector<2x16xf32>
    %58 = vector.shape_cast %57 : vector<2x16xf32> to vector<2x16x1xf32>
    %59 = vector.broadcast %58 : vector<2x16x1xf32> to vector<2x16x16xf32>
    %60 = arith.subf %56, %59 : vector<2x16x16xf32>
    %61 = math.exp %60 : vector<2x16x16xf32>
    %cst_18 = arith.constant dense<0.000000e+00> : vector<2x16xf32>
    %62 = vector.multi_reduction <add>, %61, %cst_18 [2] : vector<2x16x16xf32> to vector<2x16xf32>
    %63 = vector.shape_cast %62 : vector<2x16xf32> to vector<2x16x1xf32>
    %64 = tpu.reciprocal %63 {approx = true} : vector<2x16x1xf32> -> vector<2x16x1xf32>
    %65 = vector.broadcast %64 : vector<2x16x1xf32> to vector<2x16x16xf32>
    %66 = arith.mulf %61, %65 : vector<2x16x16xf32>
    %67 = arith.truncf %66 : vector<2x16x16xf32> to vector<2x16x16xbf16>
    %68 = arith.truncf %53 : vector<2x16x16xf32> to vector<2x16x16xbf16>
    "tpu.trace_start"() <{level = 10 : i32, message = "bqk,bkd->bqd"}> : () -> ()
    %cst_19 = arith.constant dense<0.000000e+00> : vector<2x16x16xf32>
    %69 = tpu.matmul %67, %68, %cst_19 {dimension_numbers = #tpu.dot_dimension_numbers<[2], [1], [1], [2], [0, 0, 0, 1, 1, 2], [0], [0]>} : vector<2x16x16xbf16>, vector<2x16x16xbf16>, vector<2x16x16xf32> -> vector<2x16x16xf32>
    "tpu.trace_stop"() : () -> ()
    %70 = vector.shape_cast %69 : vector<2x16x16xf32> to vector<32x16xf32>
    %c0_20 = arith.constant 0 : index
    %c16 = arith.constant 16 : index
    %71 = vector.load %arg6[%c0_20, %c16] : memref<32x32xf32, #tpu.memory_space<vmem>>, vector<32x16xf32>
    tpu.vector_store %arg6[%c0_20, %c16], %70 {strides = array<i32>} : memref<32x32xf32, #tpu.memory_space<vmem>>, vector<32x16xf32>,
    %c0_21 = arith.constant 0 : index
    %c0_22 = arith.constant 0 : index
    %72 = vector.load %arg6[%c0_21, %c0_22] : memref<32x32xf32, #tpu.memory_space<vmem>>, vector<32x32xf32>
    %c0_23 = arith.constant 0 : index
    %c96 = arith.constant 96 : index
    %73 = vector.load %arg2[%c0_23, %c96] : memref<32x678xf32, #tpu.memory_space<vmem>>, vector<32x32xf32>
    %74 = arith.truncf %72 : vector<32x32xf32> to vector<32x32xbf16>
    %75 = arith.truncf %73 : vector<32x32xf32> to vector<32x32xbf16>
    %cst_24 = arith.constant dense<0.000000e+00> : vector<32x32xf32>
    %76 = tpu.matmul %74, %75, %cst_24 {dimension_numbers = #tpu.dot_dimension_numbers<[1], [0], [0], [1], [0, 0, 1, 1], [], []>} : vector<32x32xbf16>, vector<32x32xbf16>, vector<32x32xf32> -> vector<32x32xf32>
    %c326 = arith.constant 326 : index
    %c0_25 = arith.constant 0 : index
    %77 = vector.load %arg3[%c326, %c0_25] : memref<350x32xf32, #tpu.memory_space<vmem>>, vector<1x32xf32>
    %78 = vector.broadcast %77 : vector<1x32xf32> to vector<32x32xf32>
    %79 = arith.addf %76, %78 : vector<32x32xf32>
    %80 = arith.addf %13, %79 : vector<32x32xf32>
    %c328 = arith.constant 328 : index
    %c0_26 = arith.constant 0 : index
    %81 = vector.load %arg3[%c328, %c0_26] : memref<350x32xf32, #tpu.memory_space<vmem>>, vector<1x32xf32>
    %c329 = arith.constant 329 : index
    %c0_27 = arith.constant 0 : index
    %82 = vector.load %arg3[%c329, %c0_27] : memref<350x32xf32, #tpu.memory_space<vmem>>, vector<1x32xf32>
    %cst_28 = arith.constant dense<0.000000e+00> : vector<32xf32>
    %83 = vector.multi_reduction <add>, %80, %cst_28 [1] : vector<32x32xf32> to vector<32xf32>
    %84 = vector.shape_cast %83 : vector<32xf32> to vector<32x1xf32>
    %cst_29 = arith.constant 3.200000e+01 : f32
    %85 = vector.broadcast %cst_29 : f32 to vector<32x1xf32>
    %86 = arith.divf %84, %85 : vector<32x1xf32>
    %87 = vector.broadcast %86 : vector<32x1xf32> to vector<32x32xf32>
    %88 = arith.subf %80, %87 : vector<32x32xf32>
    %89 = arith.mulf %88, %88 : vector<32x32xf32>
    %cst_30 = arith.constant dense<0.000000e+00> : vector<32xf32>
    %90 = vector.multi_reduction <add>, %89, %cst_30 [1] : vector<32x32xf32> to vector<32xf32>
    %91 = vector.shape_cast %90 : vector<32xf32> to vector<32x1xf32>
    %cst_31 = arith.constant 3.200000e+01 : f32
    %92 = vector.broadcast %cst_31 : f32 to vector<32x1xf32>
    %93 = arith.divf %91, %92 : vector<32x1xf32>
    %cst_32 = arith.constant 9.99999974E-6 : f32
    %94 = vector.broadcast %cst_32 : f32 to vector<32x1xf32>
    %95 = arith.addf %93, %94 : vector<32x1xf32>
    %96 = math.rsqrt %95 : vector<32x1xf32>
    %97 = vector.broadcast %96 : vector<32x1xf32> to vector<32x32xf32>
    %98 = arith.mulf %88, %97 : vector<32x32xf32>
    %99 = vector.broadcast %81 : vector<1x32xf32> to vector<32x32xf32>
    %100 = arith.mulf %98, %99 : vector<32x32xf32>
    %101 = vector.broadcast %82 : vector<1x32xf32> to vector<32x32xf32>
    %102 = arith.addf %100, %101 : vector<32x32xf32>
    %c0_33 = arith.constant 0 : index
    %c128 = arith.constant 128 : index
    %103 = vector.load %arg2[%c0_33, %c128] : memref<32x678xf32, #tpu.memory_space<vmem>>, vector<32x128xf32>
    %104 = arith.truncf %102 : vector<32x32xf32> to vector<32x32xbf16>
    %105 = arith.truncf %103 : vector<32x128xf32> to vector<32x128xbf16>
    %cst_34 = arith.constant dense<0.000000e+00> : vector<32x128xf32>
    %106 = tpu.matmul %104, %105, %cst_34 {dimension_numbers = #tpu.dot_dimension_numbers<[1], [0], [0], [1], [0, 0, 1, 1], [], []>} : vector<32x32xbf16>, vector<32x128xbf16>, vector<32x128xf32> -> vector<32x128xf32>
    %c1 = arith.constant 1 : index
    %c0_35 = arith.constant 0 : index
    %107 = vector.load %arg4[%c1, %c0_35] : memref<6x128xf32, #tpu.memory_space<vmem>>, vector<1x128xf32>
    %108 = vector.broadcast %107 : vector<1x128xf32> to vector<32x128xf32>
    %109 = arith.addf %106, %108 : vector<32x128xf32>
    %cst_36 = arith.constant 5.000000e-01 : f32
    %110 = vector.broadcast %cst_36 : f32 to vector<32x128xf32>
    %111 = arith.mulf %110, %109 : vector<32x128xf32>
    %cst_37 = arith.constant 4.471500e-02 : f32
    %112 = vector.broadcast %cst_37 : f32 to vector<32x128xf32>
    %113 = arith.mulf %112, %109 : vector<32x128xf32>
    %114 = arith.mulf %113, %109 : vector<32x128xf32>
    %115 = arith.mulf %114, %109 : vector<32x128xf32>
    %116 = arith.addf %109, %115 : vector<32x128xf32>
    %cst_38 = arith.constant 0.797884583 : f32
    %117 = vector.broadcast %cst_38 : f32 to vector<32x128xf32>
    %118 = arith.mulf %117, %116 : vector<32x128xf32>
    %119 = math.tanh %118 : vector<32x128xf32>
    %cst_39 = arith.constant 1.000000e+00 : f32
    %120 = vector.broadcast %cst_39 : f32 to vector<32x128xf32>
    %121 = arith.addf %120, %119 : vector<32x128xf32>
    %122 = arith.mulf %111, %121 : vector<32x128xf32>
    %c65 = arith.constant 65 : index
    %c0_40 = arith.constant 0 : index
    %123 = vector.load %arg3[%c65, %c0_40] : memref<350x32xf32, #tpu.memory_space<vmem>>, vector<128x32xf32>
    %124 = arith.truncf %122 : vector<32x128xf32> to vector<32x128xbf16>
    %125 = arith.truncf %123 : vector<128x32xf32> to vector<128x32xbf16>
    %cst_41 = arith.constant dense<0.000000e+00> : vector<32x32xf32>
    %126 = tpu.matmul %124, %125, %cst_41 {dimension_numbers = #tpu.dot_dimension_numbers<[1], [0], [0], [1], [0, 0, 1, 1], [], []>} : vector<32x128xbf16>, vector<128x32xbf16>, vector<32x32xf32> -> vector<32x32xf32>
    %c327 = arith.constant 327 : index
    %c0_42 = arith.constant 0 : index
    %127 = vector.load %arg3[%c327, %c0_42] : memref<350x32xf32, #tpu.memory_space<vmem>>, vector<1x32xf32>
    %128 = vector.broadcast %127 : vector<1x32xf32> to vector<32x32xf32>
    %129 = arith.addf %126, %128 : vector<32x32xf32>
    %130 = arith.addf %102, %129 : vector<32x32xf32>
    %c330 = arith.constant 330 : index
    %c0_43 = arith.constant 0 : index
    %131 = vector.load %arg3[%c330, %c0_43] : memref<350x32xf32, #tpu.memory_space<vmem>>, vector<1x32xf32>
    %c331 = arith.constant 331 : index
    %c0_44 = arith.constant 0 : index
    %132 = vector.load %arg3[%c331, %c0_44] : memref<350x32xf32, #tpu.memory_space<vmem>>, vector<1x32xf32>
    %cst_45 = arith.constant dense<0.000000e+00> : vector<32xf32>
    %133 = vector.multi_reduction <add>, %130, %cst_45 [1] : vector<32x32xf32> to vector<32xf32>
    %134 = vector.shape_cast %133 : vector<32xf32> to vector<32x1xf32>
    %cst_46 = arith.constant 3.200000e+01 : f32
    %135 = vector.broadcast %cst_46 : f32 to vector<32x1xf32>
    %136 = arith.divf %134, %135 : vector<32x1xf32>
    %137 = vector.broadcast %136 : vector<32x1xf32> to vector<32x32xf32>
    %138 = arith.subf %130, %137 : vector<32x32xf32>
    %139 = arith.mulf %138, %138 : vector<32x32xf32>
    %cst_47 = arith.constant dense<0.000000e+00> : vector<32xf32>
    %140 = vector.multi_reduction <add>, %139, %cst_47 [1] : vector<32x32xf32> to vector<32xf32>
    %141 = vector.shape_cast %140 : vector<32xf32> to vector<32x1xf32>
    %cst_48 = arith.constant 3.200000e+01 : f32
    %142 = vector.broadcast %cst_48 : f32 to vector<32x1xf32>
    %143 = arith.divf %141, %142 : vector<32x1xf32>
    %cst_49 = arith.constant 9.99999974E-6 : f32
    %144 = vector.broadcast %cst_49 : f32 to vector<32x1xf32>
    %145 = arith.addf %143, %144 : vector<32x1xf32>
    %146 = math.rsqrt %145 : vector<32x1xf32>
    %147 = vector.broadcast %146 : vector<32x1xf32> to vector<32x32xf32>
    %148 = arith.mulf %138, %147 : vector<32x32xf32>
    %149 = vector.broadcast %131 : vector<1x32xf32> to vector<32x32xf32>
    %150 = arith.mulf %148, %149 : vector<32x32xf32>
    %151 = vector.broadcast %132 : vector<1x32xf32> to vector<32x32xf32>
    %152 = arith.addf %150, %151 : vector<32x32xf32>
    %c332 = arith.constant 332 : index
    %c0_50 = arith.constant 0 : index
    %153 = vector.load %arg3[%c332, %c0_50] : memref<350x32xf32, #tpu.memory_space<vmem>>, vector<1x32xf32>
    %c333 = arith.constant 333 : index
    %c0_51 = arith.constant 0 : index
    %154 = vector.load %arg3[%c333, %c0_51] : memref<350x32xf32, #tpu.memory_space<vmem>>, vector<1x32xf32>
    %cst_52 = arith.constant dense<0.000000e+00> : vector<32xf32>
    %155 = vector.multi_reduction <add>, %152, %cst_52 [1] : vector<32x32xf32> to vector<32xf32>
    %156 = vector.shape_cast %155 : vector<32xf32> to vector<32x1xf32>
    %cst_53 = arith.constant 3.200000e+01 : f32
    %157 = vector.broadcast %cst_53 : f32 to vector<32x1xf32>
    %158 = arith.divf %156, %157 : vector<32x1xf32>
    %159 = vector.broadcast %158 : vector<32x1xf32> to vector<32x32xf32>
    %160 = arith.subf %152, %159 : vector<32x32xf32>
    %161 = arith.mulf %160, %160 : vector<32x32xf32>
    %cst_54 = arith.constant dense<0.000000e+00> : vector<32xf32>
    %162 = vector.multi_reduction <add>, %161, %cst_54 [1] : vector<32x32xf32> to vector<32xf32>
    %163 = vector.shape_cast %162 : vector<32xf32> to vector<32x1xf32>
    %cst_55 = arith.constant 3.200000e+01 : f32
    %164 = vector.broadcast %cst_55 : f32 to vector<32x1xf32>
    %165 = arith.divf %163, %164 : vector<32x1xf32>
    %cst_56 = arith.constant 9.99999974E-6 : f32
    %166 = vector.broadcast %cst_56 : f32 to vector<32x1xf32>
    %167 = arith.addf %165, %166 : vector<32x1xf32>
    %168 = math.rsqrt %167 : vector<32x1xf32>
    %169 = vector.broadcast %168 : vector<32x1xf32> to vector<32x32xf32>
    %170 = arith.mulf %160, %169 : vector<32x32xf32>
    %171 = vector.broadcast %153 : vector<1x32xf32> to vector<32x32xf32>
    %172 = arith.mulf %170, %171 : vector<32x32xf32>
    %173 = vector.broadcast %154 : vector<1x32xf32> to vector<32x32xf32>
    %174 = arith.addf %172, %173 : vector<32x32xf32>
    %c64 = arith.constant 64 : index
    %c0_57 = arith.constant 0 : index
    %175 = vector.load %arg3[%c64, %c0_57] : memref<350x32xf32, #tpu.memory_space<vmem>>, vector<1x32xf32>
    %176 = vector.shape_cast %175 : vector<1x32xf32> to vector<1x1x32xf32>
    %177 = vector.shape_cast %176 : vector<1x1x32xf32> to vector<1x1x32xf32>
    %178 = vector.broadcast %177 : vector<1x1x32xf32> to vector<2x1x32xf32>
    %179 = vector.shape_cast %178 : vector<2x1x32xf32> to vector<2x32xf32>
    %c0_58 = arith.constant 0 : index
    %c256 = arith.constant 256 : index
    %180 = vector.load %arg2[%c0_58, %c256] : memref<32x678xf32, #tpu.memory_space<vmem>>, vector<32x32xf32>
    %181 = arith.truncf %179 : vector<2x32xf32> to vector<2x32xbf16>
    %182 = arith.truncf %180 : vector<32x32xf32> to vector<32x32xbf16>
    %cst_59 = arith.constant dense<0.000000e+00> : vector<2x32xf32>
    %183 = tpu.matmul %181, %182, %cst_59 {dimension_numbers = #tpu.dot_dimension_numbers<[1], [0], [0], [1], [0, 0, 1, 1], [], []>} : vector<2x32xbf16>, vector<32x32xbf16>, vector<2x32xf32> -> vector<2x32xf32>
    %c334 = arith.constant 334 : index
    %c0_60 = arith.constant 0 : index
    %184 = vector.load %arg3[%c334, %c0_60] : memref<350x32xf32, #tpu.memory_space<vmem>>, vector<1x32xf32>
    %185 = vector.broadcast %184 : vector<1x32xf32> to vector<2x32xf32>
    %186 = arith.addf %183, %185 : vector<2x32xf32>
    %187 = arith.addf %179, %186 : vector<2x32xf32>
    %c338 = arith.constant 338 : index
    %c0_61 = arith.constant 0 : index
    %188 = vector.load %arg3[%c338, %c0_61] : memref<350x32xf32, #tpu.memory_space<vmem>>, vector<1x32xf32>
    %c339 = arith.constant 339 : index
    %c0_62 = arith.constant 0 : index
    %189 = vector.load %arg3[%c339, %c0_62] : memref<350x32xf32, #tpu.memory_space<vmem>>, vector<1x32xf32>
    %cst_63 = arith.constant dense<0.000000e+00> : vector<2xf32>
    %190 = vector.multi_reduction <add>, %187, %cst_63 [1] : vector<2x32xf32> to vector<2xf32>
    %191 = vector.shape_cast %190 : vector<2xf32> to vector<2x1xf32>
    %cst_64 = arith.constant 3.200000e+01 : f32
    %192 = vector.broadcast %cst_64 : f32 to vector<2x1xf32>
    %193 = arith.divf %191, %192 : vector<2x1xf32>
    %194 = vector.broadcast %193 : vector<2x1xf32> to vector<2x32xf32>
    %195 = arith.subf %187, %194 : vector<2x32xf32>
    %196 = arith.mulf %195, %195 : vector<2x32xf32>
    %cst_65 = arith.constant dense<0.000000e+00> : vector<2xf32>
    %197 = vector.multi_reduction <add>, %196, %cst_65 [1] : vector<2x32xf32> to vector<2xf32>
    %198 = vector.shape_cast %197 : vector<2xf32> to vector<2x1xf32>
    %cst_66 = arith.constant 3.200000e+01 : f32
    %199 = vector.broadcast %cst_66 : f32 to vector<2x1xf32>
    %200 = arith.divf %198, %199 : vector<2x1xf32>
    %cst_67 = arith.constant 9.99999974E-6 : f32
    %201 = vector.broadcast %cst_67 : f32 to vector<2x1xf32>
    %202 = arith.addf %200, %201 : vector<2x1xf32>
    %203 = math.rsqrt %202 : vector<2x1xf32>
    %204 = vector.broadcast %203 : vector<2x1xf32> to vector<2x32xf32>
    %205 = arith.mulf %195, %204 : vector<2x32xf32>
    %206 = vector.broadcast %188 : vector<1x32xf32> to vector<2x32xf32>
    %207 = arith.mulf %205, %206 : vector<2x32xf32>
    %208 = vector.broadcast %189 : vector<1x32xf32> to vector<2x32xf32>
    %209 = arith.addf %207, %208 : vector<2x32xf32>
    %c0_68 = arith.constant 0 : index
    %c288 = arith.constant 288 : index
    %210 = vector.load %arg2[%c0_68, %c288] : memref<32x678xf32, #tpu.memory_space<vmem>>, vector<32x32xf32>
    %211 = arith.truncf %209 : vector<2x32xf32> to vector<2x32xbf16>
    %212 = arith.truncf %210 : vector<32x32xf32> to vector<32x32xbf16>
    %cst_69 = arith.constant dense<0.000000e+00> : vector<2x32xf32>
    %213 = tpu.matmul %211, %212, %cst_69 {dimension_numbers = #tpu.dot_dimension_numbers<[1], [0], [0], [1], [0, 0, 1, 1], [], []>} : vector<2x32xbf16>, vector<32x32xbf16>, vector<2x32xf32> -> vector<2x32xf32>
    %c335 = arith.constant 335 : index
    %c0_70 = arith.constant 0 : index
    %214 = vector.load %arg3[%c335, %c0_70] : memref<350x32xf32, #tpu.memory_space<vmem>>, vector<1x32xf32>
    %215 = vector.broadcast %214 : vector<1x32xf32> to vector<2x32xf32>
    %216 = arith.addf %213, %215 : vector<2x32xf32>
    %c0_71 = arith.constant 0 : index
    %c320 = arith.constant 320 : index
    %217 = vector.load %arg2[%c0_71, %c320] : memref<32x678xf32, #tpu.memory_space<vmem>>, vector<32x64xf32>
    %218 = arith.truncf %174 : vector<32x32xf32> to vector<32x32xbf16>
    %219 = arith.truncf %217 : vector<32x64xf32> to vector<32x64xbf16>
    %cst_72 = arith.constant dense<0.000000e+00> : vector<32x64xf32>
    %220 = tpu.matmul %218, %219, %cst_72 {dimension_numbers = #tpu.dot_dimension_numbers<[1], [0], [0], [1], [0, 0, 1, 1], [], []>} : vector<32x32xbf16>, vector<32x64xbf16>, vector<32x64xf32> -> vector<32x64xf32>
    %c2 = arith.constant 2 : index
    %c0_73 = arith.constant 0 : index
    %221 = vector.load %arg4[%c2, %c0_73] : memref<6x128xf32, #tpu.memory_space<vmem>>, vector<1x64xf32>
    %222 = vector.broadcast %221 : vector<1x64xf32> to vector<32x64xf32>
    %223 = arith.addf %220, %222 : vector<32x64xf32>
    %224 = vector.extract_strided_slice %223 {offsets = [0, 0], sizes = [32, 32], strides = [1, 1]} : vector<32x64xf32> to vector<32x32xf32>
    %225 = vector.extract_strided_slice %223 {offsets = [0, 32], sizes = [32, 32], strides = [1, 1]} : vector<32x64xf32> to vector<32x32xf32>
    %226 = vector.extract_strided_slice %216 {offsets = [0, 0], sizes = [2, 16], strides = [1, 1]} : vector<2x32xf32> to vector<2x16xf32>
    %227 = vector.shape_cast %226 : vector<2x16xf32> to vector<2x1x16xf32>
    %228 = vector.extract_strided_slice %224 {offsets = [0, 0], sizes = [32, 16], strides = [1, 1]} : vector<32x32xf32> to vector<32x16xf32>
    %229 = vector.shape_cast %228 : vector<32x16xf32> to vector<2x16x16xf32>
    %230 = vector.extract_strided_slice %225 {offsets = [0, 0], sizes = [32, 16], strides = [1, 1]} : vector<32x32xf32> to vector<32x16xf32>
    %231 = vector.shape_cast %230 : vector<32x16xf32> to vector<2x16x16xf32>
    %232 = arith.truncf %227 : vector<2x1x16xf32> to vector<2x1x16xbf16>
    %233 = arith.truncf %229 : vector<2x16x16xf32> to vector<2x16x16xbf16>
    "tpu.trace_start"() <{level = 10 : i32, message = "bqd,bkd->bqk"}> : () -> ()
    %cst_74 = arith.constant dense<0.000000e+00> : vector<2x1x16xf32>
    %234 = tpu.matmul %232, %233, %cst_74 {dimension_numbers = #tpu.dot_dimension_numbers<[2], [2], [1], [1], [0, 0, 0, 1, 1, 1], [0], [0]>} : vector<2x1x16xbf16>, vector<2x16x16xbf16>, vector<2x1x16xf32> -> vector<2x1x16xf32>
    "tpu.trace_stop"() : () -> ()
    %cst_75 = arith.constant dense<0xFF800000> : vector<2x1xf32>
    %235 = vector.multi_reduction <maximumf>, %234, %cst_75 [2] : vector<2x1x16xf32> to vector<2x1xf32>
    %236 = vector.shape_cast %235 : vector<2x1xf32> to vector<2x1x1xf32>
    %237 = vector.broadcast %236 : vector<2x1x1xf32> to vector<2x1x16xf32>
    %238 = arith.subf %234, %237 : vector<2x1x16xf32>
    %239 = math.exp %238 : vector<2x1x16xf32>
    %cst_76 = arith.constant dense<0.000000e+00> : vector<2x1xf32>
    %240 = vector.multi_reduction <add>, %239, %cst_76 [2] : vector<2x1x16xf32> to vector<2x1xf32>
    %241 = vector.shape_cast %240 : vector<2x1xf32> to vector<2x1x1xf32>
    %242 = tpu.reciprocal %241 {approx = true} : vector<2x1x1xf32> -> vector<2x1x1xf32>
    %243 = vector.broadcast %242 : vector<2x1x1xf32> to vector<2x1x16xf32>
    %244 = arith.mulf %239, %243 : vector<2x1x16xf32>
    %245 = arith.truncf %244 : vector<2x1x16xf32> to vector<2x1x16xbf16>
    %246 = arith.truncf %231 : vector<2x16x16xf32> to vector<2x16x16xbf16>
    "tpu.trace_start"() <{level = 10 : i32, message = "bqk,bkd->bqd"}> : () -> ()
    %cst_77 = arith.constant dense<0.000000e+00> : vector<2x1x16xf32>
    %247 = tpu.matmul %245, %246, %cst_77 {dimension_numbers = #tpu.dot_dimension_numbers<[2], [1], [1], [2], [0, 0, 0, 1, 1, 2], [0], [0]>} : vector<2x1x16xbf16>, vector<2x16x16xbf16>, vector<2x1x16xf32> -> vector<2x1x16xf32>
    "tpu.trace_stop"() : () -> ()
    %248 = vector.shape_cast %247 : vector<2x1x16xf32> to vector<2x16xf32>
    %c0_78 = arith.constant 0 : index
    %c0_79 = arith.constant 0 : index
    %249 = vector.load %arg6[%c0_78, %c0_79] : memref<32x32xf32, #tpu.memory_space<vmem>>, vector<2x16xf32>
    tpu.vector_store %arg6[%c0_78, %c0_79], %248 {strides = array<i32>} : memref<32x32xf32, #tpu.memory_space<vmem>>, vector<2x16xf32>,
    %250 = vector.extract_strided_slice %216 {offsets = [0, 16], sizes = [2, 16], strides = [1, 1]} : vector<2x32xf32> to vector<2x16xf32>
    %251 = vector.shape_cast %250 : vector<2x16xf32> to vector<2x1x16xf32>
    %252 = vector.extract_strided_slice %224 {offsets = [0, 16], sizes = [32, 16], strides = [1, 1]} : vector<32x32xf32> to vector<32x16xf32>
    %253 = vector.shape_cast %252 : vector<32x16xf32> to vector<2x16x16xf32>
    %254 = vector.extract_strided_slice %225 {offsets = [0, 16], sizes = [32, 16], strides = [1, 1]} : vector<32x32xf32> to vector<32x16xf32>
    %255 = vector.shape_cast %254 : vector<32x16xf32> to vector<2x16x16xf32>
    %256 = arith.truncf %251 : vector<2x1x16xf32> to vector<2x1x16xbf16>
    %257 = arith.truncf %253 : vector<2x16x16xf32> to vector<2x16x16xbf16>
    "tpu.trace_start"() <{level = 10 : i32, message = "bqd,bkd->bqk"}> : () -> ()
    %cst_80 = arith.constant dense<0.000000e+00> : vector<2x1x16xf32>
    %258 = tpu.matmul %256, %257, %cst_80 {dimension_numbers = #tpu.dot_dimension_numbers<[2], [2], [1], [1], [0, 0, 0, 1, 1, 1], [0], [0]>} : vector<2x1x16xbf16>, vector<2x16x16xbf16>, vector<2x1x16xf32> -> vector<2x1x16xf32>
    "tpu.trace_stop"() : () -> ()
    %cst_81 = arith.constant dense<0xFF800000> : vector<2x1xf32>
    %259 = vector.multi_reduction <maximumf>, %258, %cst_81 [2] : vector<2x1x16xf32> to vector<2x1xf32>
    %260 = vector.shape_cast %259 : vector<2x1xf32> to vector<2x1x1xf32>
    %261 = vector.broadcast %260 : vector<2x1x1xf32> to vector<2x1x16xf32>
    %262 = arith.subf %258, %261 : vector<2x1x16xf32>
    %263 = math.exp %262 : vector<2x1x16xf32>
    %cst_82 = arith.constant dense<0.000000e+00> : vector<2x1xf32>
    %264 = vector.multi_reduction <add>, %263, %cst_82 [2] : vector<2x1x16xf32> to vector<2x1xf32>
    %265 = vector.shape_cast %264 : vector<2x1xf32> to vector<2x1x1xf32>
    %266 = tpu.reciprocal %265 {approx = true} : vector<2x1x1xf32> -> vector<2x1x1xf32>
    %267 = vector.broadcast %266 : vector<2x1x1xf32> to vector<2x1x16xf32>
    %268 = arith.mulf %263, %267 : vector<2x1x16xf32>
    %269 = arith.truncf %268 : vector<2x1x16xf32> to vector<2x1x16xbf16>
    %270 = arith.truncf %255 : vector<2x16x16xf32> to vector<2x16x16xbf16>
    "tpu.trace_start"() <{level = 10 : i32, message = "bqk,bkd->bqd"}> : () -> ()
    %cst_83 = arith.constant dense<0.000000e+00> : vector<2x1x16xf32>
    %271 = tpu.matmul %269, %270, %cst_83 {dimension_numbers = #tpu.dot_dimension_numbers<[2], [1], [1], [2], [0, 0, 0, 1, 1, 2], [0], [0]>} : vector<2x1x16xbf16>, vector<2x16x16xbf16>, vector<2x1x16xf32> -> vector<2x1x16xf32>
    "tpu.trace_stop"() : () -> ()
    %272 = vector.shape_cast %271 : vector<2x1x16xf32> to vector<2x16xf32>
    %c0_84 = arith.constant 0 : index
    %c16_85 = arith.constant 16 : index
    %273 = vector.load %arg6[%c0_84, %c16_85] : memref<32x32xf32, #tpu.memory_space<vmem>>, vector<2x16xf32>
    tpu.vector_store %arg6[%c0_84, %c16_85], %272 {strides = array<i32>} : memref<32x32xf32, #tpu.memory_space<vmem>>, vector<2x16xf32>,
    %c0_86 = arith.constant 0 : index
    %c0_87 = arith.constant 0 : index
    %274 = vector.load %arg6[%c0_86, %c0_87] : memref<32x32xf32, #tpu.memory_space<vmem>>, vector<2x32xf32>
    %c0_88 = arith.constant 0 : index
    %c384 = arith.constant 384 : index
    %275 = vector.load %arg2[%c0_88, %c384] : memref<32x678xf32, #tpu.memory_space<vmem>>, vector<32x32xf32>
    %276 = arith.truncf %274 : vector<2x32xf32> to vector<2x32xbf16>
    %277 = arith.truncf %275 : vector<32x32xf32> to vector<32x32xbf16>
    %cst_89 = arith.constant dense<0.000000e+00> : vector<2x32xf32>
    %278 = tpu.matmul %276, %277, %cst_89 {dimension_numbers = #tpu.dot_dimension_numbers<[1], [0], [0], [1], [0, 0, 1, 1], [], []>} : vector<2x32xbf16>, vector<32x32xbf16>, vector<2x32xf32> -> vector<2x32xf32>
    %c336 = arith.constant 336 : index
    %c0_90 = arith.constant 0 : index
    %279 = vector.load %arg3[%c336, %c0_90] : memref<350x32xf32, #tpu.memory_space<vmem>>, vector<1x32xf32>
    %280 = vector.broadcast %279 : vector<1x32xf32> to vector<2x32xf32>
    %281 = arith.addf %278, %280 : vector<2x32xf32>
    %282 = arith.addf %209, %281 : vector<2x32xf32>
    %c340 = arith.constant 340 : index
    %c0_91 = arith.constant 0 : index
    %283 = vector.load %arg3[%c340, %c0_91] : memref<350x32xf32, #tpu.memory_space<vmem>>, vector<1x32xf32>
    %c341 = arith.constant 341 : index
    %c0_92 = arith.constant 0 : index
    %284 = vector.load %arg3[%c341, %c0_92] : memref<350x32xf32, #tpu.memory_space<vmem>>, vector<1x32xf32>
    %cst_93 = arith.constant dense<0.000000e+00> : vector<2xf32>
    %285 = vector.multi_reduction <add>, %282, %cst_93 [1] : vector<2x32xf32> to vector<2xf32>
    %286 = vector.shape_cast %285 : vector<2xf32> to vector<2x1xf32>
    %cst_94 = arith.constant 3.200000e+01 : f32
    %287 = vector.broadcast %cst_94 : f32 to vector<2x1xf32>
    %288 = arith.divf %286, %287 : vector<2x1xf32>
    %289 = vector.broadcast %288 : vector<2x1xf32> to vector<2x32xf32>
    %290 = arith.subf %282, %289 : vector<2x32xf32>
    %291 = arith.mulf %290, %290 : vector<2x32xf32>
    %cst_95 = arith.constant dense<0.000000e+00> : vector<2xf32>
    %292 = vector.multi_reduction <add>, %291, %cst_95 [1] : vector<2x32xf32> to vector<2xf32>
    %293 = vector.shape_cast %292 : vector<2xf32> to vector<2x1xf32>
    %cst_96 = arith.constant 3.200000e+01 : f32
    %294 = vector.broadcast %cst_96 : f32 to vector<2x1xf32>
    %295 = arith.divf %293, %294 : vector<2x1xf32>
    %cst_97 = arith.constant 9.99999974E-6 : f32
    %296 = vector.broadcast %cst_97 : f32 to vector<2x1xf32>
    %297 = arith.addf %295, %296 : vector<2x1xf32>
    %298 = math.rsqrt %297 : vector<2x1xf32>
    %299 = vector.broadcast %298 : vector<2x1xf32> to vector<2x32xf32>
    %300 = arith.mulf %290, %299 : vector<2x32xf32>
    %301 = vector.broadcast %283 : vector<1x32xf32> to vector<2x32xf32>
    %302 = arith.mulf %300, %301 : vector<2x32xf32>
    %303 = vector.broadcast %284 : vector<1x32xf32> to vector<2x32xf32>
    %304 = arith.addf %302, %303 : vector<2x32xf32>
    %c0_98 = arith.constant 0 : index
    %c416 = arith.constant 416 : index
    %305 = vector.load %arg2[%c0_98, %c416] : memref<32x678xf32, #tpu.memory_space<vmem>>, vector<32x128xf32>
    %306 = arith.truncf %304 : vector<2x32xf32> to vector<2x32xbf16>
    %307 = arith.truncf %305 : vector<32x128xf32> to vector<32x128xbf16>
    %cst_99 = arith.constant dense<0.000000e+00> : vector<2x128xf32>
    %308 = tpu.matmul %306, %307, %cst_99 {dimension_numbers = #tpu.dot_dimension_numbers<[1], [0], [0], [1], [0, 0, 1, 1], [], []>} : vector<2x32xbf16>, vector<32x128xbf16>, vector<2x128xf32> -> vector<2x128xf32>
    %c3 = arith.constant 3 : index
    %c0_100 = arith.constant 0 : index
    %309 = vector.load %arg4[%c3, %c0_100] : memref<6x128xf32, #tpu.memory_space<vmem>>, vector<1x128xf32>
    %310 = vector.broadcast %309 : vector<1x128xf32> to vector<2x128xf32>
    %311 = arith.addf %308, %310 : vector<2x128xf32>
    %cst_101 = arith.constant 5.000000e-01 : f32
    %312 = vector.broadcast %cst_101 : f32 to vector<2x128xf32>
    %313 = arith.mulf %312, %311 : vector<2x128xf32>
    %cst_102 = arith.constant 4.471500e-02 : f32
    %314 = vector.broadcast %cst_102 : f32 to vector<2x128xf32>
    %315 = arith.mulf %314, %311 : vector<2x128xf32>
    %316 = arith.mulf %315, %311 : vector<2x128xf32>
    %317 = arith.mulf %316, %311 : vector<2x128xf32>
    %318 = arith.addf %311, %317 : vector<2x128xf32>
    %cst_103 = arith.constant 0.797884583 : f32
    %319 = vector.broadcast %cst_103 : f32 to vector<2x128xf32>
    %320 = arith.mulf %319, %318 : vector<2x128xf32>
    %321 = math.tanh %320 : vector<2x128xf32>
    %cst_104 = arith.constant 1.000000e+00 : f32
    %322 = vector.broadcast %cst_104 : f32 to vector<2x128xf32>
    %323 = arith.addf %322, %321 : vector<2x128xf32>
    %324 = arith.mulf %313, %323 : vector<2x128xf32>
    %c193 = arith.constant 193 : index
    %c0_105 = arith.constant 0 : index
    %325 = vector.load %arg3[%c193, %c0_105] : memref<350x32xf32, #tpu.memory_space<vmem>>, vector<128x32xf32>
    %326 = arith.truncf %324 : vector<2x128xf32> to vector<2x128xbf16>
    %327 = arith.truncf %325 : vector<128x32xf32> to vector<128x32xbf16>
    %cst_106 = arith.constant dense<0.000000e+00> : vector<2x32xf32>
    %328 = tpu.matmul %326, %327, %cst_106 {dimension_numbers = #tpu.dot_dimension_numbers<[1], [0], [0], [1], [0, 0, 1, 1], [], []>} : vector<2x128xbf16>, vector<128x32xbf16>, vector<2x32xf32> -> vector<2x32xf32>
    %c337 = arith.constant 337 : index
    %c0_107 = arith.constant 0 : index
    %329 = vector.load %arg3[%c337, %c0_107] : memref<350x32xf32, #tpu.memory_space<vmem>>, vector<1x32xf32>
    %330 = vector.broadcast %329 : vector<1x32xf32> to vector<2x32xf32>
    %331 = arith.addf %328, %330 : vector<2x32xf32>
    %332 = arith.addf %304, %331 : vector<2x32xf32>
    %c342 = arith.constant 342 : index
    %c0_108 = arith.constant 0 : index
    %333 = vector.load %arg3[%c342, %c0_108] : memref<350x32xf32, #tpu.memory_space<vmem>>, vector<1x32xf32>
    %c343 = arith.constant 343 : index
    %c0_109 = arith.constant 0 : index
    %334 = vector.load %arg3[%c343, %c0_109] : memref<350x32xf32, #tpu.memory_space<vmem>>, vector<1x32xf32>
    %cst_110 = arith.constant dense<0.000000e+00> : vector<2xf32>
    %335 = vector.multi_reduction <add>, %332, %cst_110 [1] : vector<2x32xf32> to vector<2xf32>
    %336 = vector.shape_cast %335 : vector<2xf32> to vector<2x1xf32>
    %cst_111 = arith.constant 3.200000e+01 : f32
    %337 = vector.broadcast %cst_111 : f32 to vector<2x1xf32>
    %338 = arith.divf %336, %337 : vector<2x1xf32>
    %339 = vector.broadcast %338 : vector<2x1xf32> to vector<2x32xf32>
    %340 = arith.subf %332, %339 : vector<2x32xf32>
    %341 = arith.mulf %340, %340 : vector<2x32xf32>
    %cst_112 = arith.constant dense<0.000000e+00> : vector<2xf32>
    %342 = vector.multi_reduction <add>, %341, %cst_112 [1] : vector<2x32xf32> to vector<2xf32>
    %343 = vector.shape_cast %342 : vector<2xf32> to vector<2x1xf32>
    %cst_113 = arith.constant 3.200000e+01 : f32
    %344 = vector.broadcast %cst_113 : f32 to vector<2x1xf32>
    %345 = arith.divf %343, %344 : vector<2x1xf32>
    %cst_114 = arith.constant 9.99999974E-6 : f32
    %346 = vector.broadcast %cst_114 : f32 to vector<2x1xf32>
    %347 = arith.addf %345, %346 : vector<2x1xf32>
    %348 = math.rsqrt %347 : vector<2x1xf32>
    %349 = vector.broadcast %348 : vector<2x1xf32> to vector<2x32xf32>
    %350 = arith.mulf %340, %349 : vector<2x32xf32>
    %351 = vector.broadcast %333 : vector<1x32xf32> to vector<2x32xf32>
    %352 = arith.mulf %350, %351 : vector<2x32xf32>
    %353 = vector.broadcast %334 : vector<1x32xf32> to vector<2x32xf32>
    %354 = arith.addf %352, %353 : vector<2x32xf32>
    %c344 = arith.constant 344 : index
    %c0_115 = arith.constant 0 : index
    %355 = vector.load %arg3[%c344, %c0_115] : memref<350x32xf32, #tpu.memory_space<vmem>>, vector<1x32xf32>
    %c345 = arith.constant 345 : index
    %c0_116 = arith.constant 0 : index
    %356 = vector.load %arg3[%c345, %c0_116] : memref<350x32xf32, #tpu.memory_space<vmem>>, vector<1x32xf32>
    %cst_117 = arith.constant dense<0.000000e+00> : vector<2xf32>
    %357 = vector.multi_reduction <add>, %354, %cst_117 [1] : vector<2x32xf32> to vector<2xf32>
    %358 = vector.shape_cast %357 : vector<2xf32> to vector<2x1xf32>
    %cst_118 = arith.constant 3.200000e+01 : f32
    %359 = vector.broadcast %cst_118 : f32 to vector<2x1xf32>
    %360 = arith.divf %358, %359 : vector<2x1xf32>
    %361 = vector.broadcast %360 : vector<2x1xf32> to vector<2x32xf32>
    %362 = arith.subf %354, %361 : vector<2x32xf32>
    %363 = arith.mulf %362, %362 : vector<2x32xf32>
    %cst_119 = arith.constant dense<0.000000e+00> : vector<2xf32>
    %364 = vector.multi_reduction <add>, %363, %cst_119 [1] : vector<2x32xf32> to vector<2xf32>
    %365 = vector.shape_cast %364 : vector<2xf32> to vector<2x1xf32>
    %cst_120 = arith.constant 3.200000e+01 : f32
    %366 = vector.broadcast %cst_120 : f32 to vector<2x1xf32>
    %367 = arith.divf %365, %366 : vector<2x1xf32>
    %cst_121 = arith.constant 9.99999974E-6 : f32
    %368 = vector.broadcast %cst_121 : f32 to vector<2x1xf32>
    %369 = arith.addf %367, %368 : vector<2x1xf32>
    %370 = math.rsqrt %369 : vector<2x1xf32>
    %371 = vector.broadcast %370 : vector<2x1xf32> to vector<2x32xf32>
    %372 = arith.mulf %362, %371 : vector<2x32xf32>
    %373 = vector.broadcast %355 : vector<1x32xf32> to vector<2x32xf32>
    %374 = arith.mulf %372, %373 : vector<2x32xf32>
    %375 = vector.broadcast %356 : vector<1x32xf32> to vector<2x32xf32>
    %376 = arith.addf %374, %375 : vector<2x32xf32>
    %c0_122 = arith.constant 0 : index
    %c672 = arith.constant 672 : index
    %377 = vector.load %arg2[%c0_122, %c672] : memref<32x678xf32, #tpu.memory_space<vmem>>, vector<32x2xf32>
    %378 = arith.truncf %376 : vector<2x32xf32> to vector<2x32xbf16>
    %379 = arith.truncf %377 : vector<32x2xf32> to vector<32x2xbf16>
    %cst_123 = arith.constant dense<0.000000e+00> : vector<2x2xf32>
    %380 = tpu.matmul %378, %379, %cst_123 {dimension_numbers = #tpu.dot_dimension_numbers<[1], [0], [0], [1], [0, 0, 1, 1], [], []>} : vector<2x32xbf16>, vector<32x2xbf16>, vector<2x2xf32> -> vector<2x2xf32>
    %c4 = arith.constant 4 : index
    %c0_124 = arith.constant 0 : index
    %381 = vector.load %arg4[%c4, %c0_124] : memref<6x128xf32, #tpu.memory_space<vmem>>, vector<1x2xf32>
    %382 = vector.broadcast %381 : vector<1x2xf32> to vector<2x2xf32>
    %383 = arith.addf %380, %382 : vector<2x2xf32>
    %c0_125 = arith.constant 0 : index
    %c544 = arith.constant 544 : index
    %384 = vector.load %arg2[%c0_125, %c544] : memref<32x678xf32, #tpu.memory_space<vmem>>, vector<32x32xf32>
    %385 = arith.truncf %376 : vector<2x32xf32> to vector<2x32xbf16>
    %386 = arith.truncf %384 : vector<32x32xf32> to vector<32x32xbf16>
    %cst_126 = arith.constant dense<0.000000e+00> : vector<2x32xf32>
    %387 = tpu.matmul %385, %386, %cst_126 {dimension_numbers = #tpu.dot_dimension_numbers<[1], [0], [0], [1], [0, 0, 1, 1], [], []>} : vector<2x32xbf16>, vector<32x32xbf16>, vector<2x32xf32> -> vector<2x32xf32>
    %c346 = arith.constant 346 : index
    %c0_127 = arith.constant 0 : index
    %388 = vector.load %arg3[%c346, %c0_127] : memref<350x32xf32, #tpu.memory_space<vmem>>, vector<1x32xf32>
    %389 = vector.broadcast %388 : vector<1x32xf32> to vector<2x32xf32>
    %390 = arith.addf %387, %389 : vector<2x32xf32>
    %cst_128 = arith.constant 5.000000e-01 : f32
    %391 = vector.broadcast %cst_128 : f32 to vector<2x32xf32>
    %392 = arith.mulf %391, %390 : vector<2x32xf32>
    %cst_129 = arith.constant 4.471500e-02 : f32
    %393 = vector.broadcast %cst_129 : f32 to vector<2x32xf32>
    %394 = arith.mulf %393, %390 : vector<2x32xf32>
    %395 = arith.mulf %394, %390 : vector<2x32xf32>
    %396 = arith.mulf %395, %390 : vector<2x32xf32>
    %397 = arith.addf %390, %396 : vector<2x32xf32>
    %cst_130 = arith.constant 0.797884583 : f32
    %398 = vector.broadcast %cst_130 : f32 to vector<2x32xf32>
    %399 = arith.mulf %398, %397 : vector<2x32xf32>
    %400 = math.tanh %399 : vector<2x32xf32>
    %cst_131 = arith.constant 1.000000e+00 : f32
    %401 = vector.broadcast %cst_131 : f32 to vector<2x32xf32>
    %402 = arith.addf %401, %400 : vector<2x32xf32>
    %403 = arith.mulf %392, %402 : vector<2x32xf32>
    %c0_132 = arith.constant 0 : index
    %c576 = arith.constant 576 : index
    %404 = vector.load %arg2[%c0_132, %c576] : memref<32x678xf32, #tpu.memory_space<vmem>>, vector<32x32xf32>
    %405 = arith.truncf %403 : vector<2x32xf32> to vector<2x32xbf16>
    %406 = arith.truncf %404 : vector<32x32xf32> to vector<32x32xbf16>
    %cst_133 = arith.constant dense<0.000000e+00> : vector<2x32xf32>
    %407 = tpu.matmul %405, %406, %cst_133 {dimension_numbers = #tpu.dot_dimension_numbers<[1], [0], [0], [1], [0, 0, 1, 1], [], []>} : vector<2x32xbf16>, vector<32x32xbf16>, vector<2x32xf32> -> vector<2x32xf32>
    %c347 = arith.constant 347 : index
    %c0_134 = arith.constant 0 : index
    %408 = vector.load %arg3[%c347, %c0_134] : memref<350x32xf32, #tpu.memory_space<vmem>>, vector<1x32xf32>
    %409 = vector.broadcast %408 : vector<1x32xf32> to vector<2x32xf32>
    %410 = arith.addf %407, %409 : vector<2x32xf32>
    %cst_135 = arith.constant 5.000000e-01 : f32
    %411 = vector.broadcast %cst_135 : f32 to vector<2x32xf32>
    %412 = arith.mulf %411, %410 : vector<2x32xf32>
    %cst_136 = arith.constant 4.471500e-02 : f32
    %413 = vector.broadcast %cst_136 : f32 to vector<2x32xf32>
    %414 = arith.mulf %413, %410 : vector<2x32xf32>
    %415 = arith.mulf %414, %410 : vector<2x32xf32>
    %416 = arith.mulf %415, %410 : vector<2x32xf32>
    %417 = arith.addf %410, %416 : vector<2x32xf32>
    %cst_137 = arith.constant 0.797884583 : f32
    %418 = vector.broadcast %cst_137 : f32 to vector<2x32xf32>
    %419 = arith.mulf %418, %417 : vector<2x32xf32>
    %420 = math.tanh %419 : vector<2x32xf32>
    %cst_138 = arith.constant 1.000000e+00 : f32
    %421 = vector.broadcast %cst_138 : f32 to vector<2x32xf32>
    %422 = arith.addf %421, %420 : vector<2x32xf32>
    %423 = arith.mulf %412, %422 : vector<2x32xf32>
    %c0_139 = arith.constant 0 : index
    %c608 = arith.constant 608 : index
    %424 = vector.load %arg2[%c0_139, %c608] : memref<32x678xf32, #tpu.memory_space<vmem>>, vector<32x32xf32>
    %425 = arith.truncf %423 : vector<2x32xf32> to vector<2x32xbf16>
    %426 = arith.truncf %424 : vector<32x32xf32> to vector<32x32xbf16>
    %cst_140 = arith.constant dense<0.000000e+00> : vector<2x32xf32>
    %427 = tpu.matmul %425, %426, %cst_140 {dimension_numbers = #tpu.dot_dimension_numbers<[1], [0], [0], [1], [0, 0, 1, 1], [], []>} : vector<2x32xbf16>, vector<32x32xbf16>, vector<2x32xf32> -> vector<2x32xf32>
    %c348 = arith.constant 348 : index
    %c0_141 = arith.constant 0 : index
    %428 = vector.load %arg3[%c348, %c0_141] : memref<350x32xf32, #tpu.memory_space<vmem>>, vector<1x32xf32>
    %429 = vector.broadcast %428 : vector<1x32xf32> to vector<2x32xf32>
    %430 = arith.addf %427, %429 : vector<2x32xf32>
    %cst_142 = arith.constant 5.000000e-01 : f32
    %431 = vector.broadcast %cst_142 : f32 to vector<2x32xf32>
    %432 = arith.mulf %431, %430 : vector<2x32xf32>
    %cst_143 = arith.constant 4.471500e-02 : f32
    %433 = vector.broadcast %cst_143 : f32 to vector<2x32xf32>
    %434 = arith.mulf %433, %430 : vector<2x32xf32>
    %435 = arith.mulf %434, %430 : vector<2x32xf32>
    %436 = arith.mulf %435, %430 : vector<2x32xf32>
    %437 = arith.addf %430, %436 : vector<2x32xf32>
    %cst_144 = arith.constant 0.797884583 : f32
    %438 = vector.broadcast %cst_144 : f32 to vector<2x32xf32>
    %439 = arith.mulf %438, %437 : vector<2x32xf32>
    %440 = math.tanh %439 : vector<2x32xf32>
    %cst_145 = arith.constant 1.000000e+00 : f32
    %441 = vector.broadcast %cst_145 : f32 to vector<2x32xf32>
    %442 = arith.addf %441, %440 : vector<2x32xf32>
    %443 = arith.mulf %432, %442 : vector<2x32xf32>
    %c0_146 = arith.constant 0 : index
    %c640 = arith.constant 640 : index
    %444 = vector.load %arg2[%c0_146, %c640] : memref<32x678xf32, #tpu.memory_space<vmem>>, vector<32x32xf32>
    %445 = arith.truncf %443 : vector<2x32xf32> to vector<2x32xbf16>
    %446 = arith.truncf %444 : vector<32x32xf32> to vector<32x32xbf16>
    %cst_147 = arith.constant dense<0.000000e+00> : vector<2x32xf32>
    %447 = tpu.matmul %445, %446, %cst_147 {dimension_numbers = #tpu.dot_dimension_numbers<[1], [0], [0], [1], [0, 0, 1, 1], [], []>} : vector<2x32xbf16>, vector<32x32xbf16>, vector<2x32xf32> -> vector<2x32xf32>
    %c349 = arith.constant 349 : index
    %c0_148 = arith.constant 0 : index
    %448 = vector.load %arg3[%c349, %c0_148] : memref<350x32xf32, #tpu.memory_space<vmem>>, vector<1x32xf32>
    %449 = vector.broadcast %448 : vector<1x32xf32> to vector<2x32xf32>
    %450 = arith.addf %447, %449 : vector<2x32xf32>
    %cst_149 = arith.constant 5.000000e-01 : f32
    %451 = vector.broadcast %cst_149 : f32 to vector<2x32xf32>
    %452 = arith.mulf %451, %450 : vector<2x32xf32>
    %cst_150 = arith.constant 4.471500e-02 : f32
    %453 = vector.broadcast %cst_150 : f32 to vector<2x32xf32>
    %454 = arith.mulf %453, %450 : vector<2x32xf32>
    %455 = arith.mulf %454, %450 : vector<2x32xf32>
    %456 = arith.mulf %455, %450 : vector<2x32xf32>
    %457 = arith.addf %450, %456 : vector<2x32xf32>
    %cst_151 = arith.constant 0.797884583 : f32
    %458 = vector.broadcast %cst_151 : f32 to vector<2x32xf32>
    %459 = arith.mulf %458, %457 : vector<2x32xf32>
    %460 = math.tanh %459 : vector<2x32xf32>
    %cst_152 = arith.constant 1.000000e+00 : f32
    %461 = vector.broadcast %cst_152 : f32 to vector<2x32xf32>
    %462 = arith.addf %461, %460 : vector<2x32xf32>
    %463 = arith.mulf %452, %462 : vector<2x32xf32>
    %c0_153 = arith.constant 0 : index
    %c674 = arith.constant 674 : index
    %464 = vector.load %arg2[%c0_153, %c674] : memref<32x678xf32, #tpu.memory_space<vmem>>, vector<32x4xf32>
    %465 = arith.truncf %463 : vector<2x32xf32> to vector<2x32xbf16>
    %466 = arith.truncf %464 : vector<32x4xf32> to vector<32x4xbf16>
    %cst_154 = arith.constant dense<0.000000e+00> : vector<2x4xf32>
    %467 = tpu.matmul %465, %466, %cst_154 {dimension_numbers = #tpu.dot_dimension_numbers<[1], [0], [0], [1], [0, 0, 1, 1], [], []>} : vector<2x32xbf16>, vector<32x4xbf16>, vector<2x4xf32> -> vector<2x4xf32>
    %c5 = arith.constant 5 : index
    %c0_155 = arith.constant 0 : index
    %468 = vector.load %arg4[%c5, %c0_155] : memref<6x128xf32, #tpu.memory_space<vmem>>, vector<1x4xf32>
    %469 = vector.broadcast %468 : vector<1x4xf32> to vector<2x4xf32>
    %470 = arith.addf %467, %469 : vector<2x4xf32>
    %471 = arith.negf %470 : vector<2x4xf32>
    %472 = math.exp %471 : vector<2x4xf32>
    %cst_156 = arith.constant 1.000000e+00 : f32
    %473 = vector.broadcast %cst_156 : f32 to vector<2x4xf32>
    %474 = arith.addf %473, %472 : vector<2x4xf32>
    %475 = arith.divf %473, %474 : vector<2x4xf32>
    %c321 = arith.constant 321 : index
    %c0_157 = arith.constant 0 : index
    %476 = vector.load %arg3[%c321, %c0_157] : memref<350x32xf32, #tpu.memory_space<vmem>>, vector<4x4xf32>
    %cst_158 = arith.constant dense<0.000000e+00> : vector<2x4xf32>
    %477 = tpu.matmul %475, %476, %cst_158 {dimension_numbers = #tpu.dot_dimension_numbers<[1], [0], [0], [1], [0, 0, 1, 1], [], []>} : vector<2x4xf32>, vector<4x4xf32>, vector<2x4xf32> -> vector<2x4xf32>
    %cst_159 = arith.constant 0.000000e+00 : f32
    %478 = vector.broadcast %cst_159 : f32 to vector<2x128xf32>
    %c0_160 = arith.constant 0 : index
    %c0_161 = arith.constant 0 : index
    %479 = vector.load %arg5[%c0_160, %c0_161] : memref<2x128xf32, #tpu.memory_space<vmem>>, vector<2x128xf32>
    tpu.vector_store %arg5[%c0_160, %c0_161], %478 {strides = array<i32>} : memref<2x128xf32, #tpu.memory_space<vmem>>, vector<2x128xf32>,
    %c0_162 = arith.constant 0 : index
    %c0_163 = arith.constant 0 : index
    %480 = vector.load %arg5[%c0_162, %c0_163] : memref<2x128xf32, #tpu.memory_space<vmem>>, vector<2x2xf32>
    tpu.vector_store %arg5[%c0_162, %c0_163], %383 {strides = array<i32>} : memref<2x128xf32, #tpu.memory_space<vmem>>, vector<2x2xf32>,
    %c0_164 = arith.constant 0 : index
    %c2_165 = arith.constant 2 : index
    %481 = vector.load %arg5[%c0_164, %c2_165] : memref<2x128xf32, #tpu.memory_space<vmem>>, vector<2x4xf32>
    tpu.vector_store %arg5[%c0_164, %c2_165], %475 {strides = array<i32>} : memref<2x128xf32, #tpu.memory_space<vmem>>, vector<2x4xf32>,
    %c0_166 = arith.constant 0 : index
    %c6 = arith.constant 6 : index
    %482 = vector.load %arg5[%c0_166, %c6] : memref<2x128xf32, #tpu.memory_space<vmem>>, vector<2x4xf32>
    tpu.vector_store %arg5[%c0_166, %c6], %477 {strides = array<i32>} : memref<2x128xf32, #tpu.memory_space<vmem>>, vector<2x4xf32>,
    return
  }
  func.func @transform_0(%arg0: i32) -> (i32, i32) {
    %c0_i32 = arith.constant 0 : i32
    %c0_i32_0 = arith.constant 0 : i32
    %c0_i32_1 = arith.constant 0 : i32
    return %c0_i32, %c0_i32_0 : i32, i32
  }
  func.func @transform_1(%arg0: i32) -> (i32, i32) {
    %c0_i32 = arith.constant 0 : i32
    %c0_i32_0 = arith.constant 0 : i32
    %c0_i32_1 = arith.constant 0 : i32
    return %c0_i32, %c0_i32_0 : i32, i32
  }
  func.func @transform_2(%arg0: i32) -> (i32, i32) {
    %c0_i32 = arith.constant 0 : i32
    %c0_i32_0 = arith.constant 0 : i32
    %c0_i32_1 = arith.constant 0 : i32
    return %c0_i32, %c0_i32_0 : i32, i32
  }
  func.func @transform_3(%arg0: i32) -> (i32, i32) {
    %c0_i32 = arith.constant 0 : i32
    %c0_i32_0 = arith.constant 0 : i32
    %c0_i32_1 = arith.constant 0 : i32
    return %c0_i32, %c0_i32_0 : i32, i32
  }
  func.func @transform_4(%arg0: i32) -> (i32, i32) {
    %c0_i32 = arith.constant 0 : i32
    %c0_i32_0 = arith.constant 0 : i32
    %c0_i32_1 = arith.constant 0 : i32
    return %c0_i32, %c0_i32_0 : i32, i32
  }
}

</mosaic_0001>

<llo_original>
// kernel: _lambda_.1
$region0: #{_lambda_.1}
  #allocation0 [shape = 'u32[]', space=smem, size = 0x4, offset = 0x4, fixed_abs, tag = 'smem constant byte address 0x4 - core index']
  #allocation1 [shape = 'u32[72,128]{1,0:T(1,128)}', space=vmem, size = 0x9000, scoped, tag = 'internal scratch']
  #allocation2 [shape = 'f32[32,32]{1,0:T(8,128)}', space=vmem, size = 0x4000, scoped, tag = 'scratch operand']
  %s0 = inlined_call_operand.vmem [shape: f32[32,48], index: 0, kind: input, shape index: {}]
  %s1 = inlined_call_operand.vmem [shape: f32[32,678], index: 1, kind: input, shape index: {}]
  %s2 = inlined_call_operand.vmem [shape: f32[350,32], index: 2, kind: input, shape index: {}]
  %s3 = inlined_call_operand.vmem [shape: f32[6,128], index: 3, kind: input, shape index: {}]
  %s4 = inlined_call_operand.vmem [shape: f32[2,128], index: 4, kind: output, shape index: {}]
  %s5 = sld [smem:[#allocation0]]
  $region26: #{_lambda_.1} parent=0
    _
  %s7 = ssub.s32 1, %s5
  %s8 = scalar_select 0, %s7, %s5
  // Predicated region
  $region2: #{_lambda_.1} parent=0 // pred_check
    _
  $region3: #{_lambda_.1} parent=0 // pred_check_branch
    %10 = sbr.rel (0) target = $region5
  $region4: #{_lambda_.1} parent=0 // pred_region
    _
  $region5: #{_lambda_.1} parent=0 // pred_fallthru
    _
  // Predicated region
  $region6: #{_lambda_.1} parent=0 // pred_check
    _
  $region7: #{_lambda_.1} parent=0 // pred_check_branch
    %12 = sbr.rel (0) target = $region9
  $region8: #{_lambda_.1} parent=0 // pred_region
    _
  $region9: #{_lambda_.1} parent=0 // pred_fallthru
    _
  // Predicated region
  $region10: #{_lambda_.1} parent=0 // pred_check
    _
  $region11: #{_lambda_.1} parent=0 // pred_check_branch
    %14 = sbr.rel (0) target = $region13
  $region12: #{_lambda_.1} parent=0 // pred_region
    _
  $region13: #{_lambda_.1} parent=0 // pred_fallthru
    _
  // Predicated region
  $region14: #{_lambda_.1} parent=0 // pred_check
    _
  $region15: #{_lambda_.1} parent=0 // pred_check_branch
    %16 = sbr.rel (0) target = $region17
  $region16: #{_lambda_.1} parent=0 // pred_region
    _
  $region17: #{_lambda_.1} parent=0 // pred_fallthru
    _
  %v18 = vld [vmem:[%s0] sm:$0xff]
  %v19 = vld [vmem:[%s0 + $0x8] sm:$0xff]
  %v20 = vld [vmem:[%s0 + $0x10] sm:$0xff]
  %v21 = vld [vmem:[%s0 + $0x18] sm:$0xff]
  %v22 = vld [vmem:[%s2] sm:$0xff]
  %v23 = vld [vmem:[%s2 + $0x8] sm:$0xff]
  %v24 = vld [vmem:[%s2 + $0x10] sm:$0xff]
  %v25 = vld [vmem:[%s2 + $0x18] sm:$0xff]
  %v26 = vld [vmem:[%s2 + $0x20] sm:$0xff]
  %v27 = vld [vmem:[%s2 + $0x28] sm:$0xff]
  %v28 = vpack.c.bf16 %v19, %v18
  %v29 = vpack.c.bf16 %v21, %v20
  %v30 = vpack.c.bf16 %v23, %v22
  %v31 = vpack.c.bf16 %v25, %v24
  %v32 = vpack.c.bf16 %v27, %v26
  %v33 = vld [vmem:[%s2 + $0x145] sm:$0x1]
  %v34 = vperm.slane %v33, 0
  %vm35 = vcmask 392192
  %v37 = vsel %vm35, %v28, 0
  %v40 = vsel %vm35, %v29, 0
  %42 = vmatpush.bf16.msra.mxu0 0
  %43 = vmatpush.bf16.msra.mxu0 0
  %44 = vmatpush.bf16.msra.mxu0 0
  %45 = vmatpush.bf16.msra.mxu0 0
  %46 = vmatpush.bf16.msra.mxu0 0
  %47 = vmatpush.bf16.msra.mxu0 %v32
  %48 = vmatpush.bf16.msra.mxu0 %v31
  %49 = vmatpush.bf16.msra.mxu0 %v30
  %50 = vmatmul.bf16.gmra.mxu0 %v37
  %v51 = vpop.f32.mrf.mxu0
  %v52 = vadd.f32 %v34, %v51
  %v53 = vpop.f32.mrf.mxu0
  %v54 = vadd.f32 %v34, %v53
  %55 = vmatmul.bf16.gmra.mxu0 %v40
  %v56 = vpop.f32.mrf.mxu0
  %v57 = vadd.f32 %v34, %v56
  %v58 = vpop.f32.mrf.mxu0
  %v59 = vadd.f32 %v34, %v58
  %60 = vdwg.mxu0
  %v61 = vld [vmem:[%s2 + $0x30] sm:$0xff]
  %v62 = vld [vmem:[%s2 + $0x38] sm:$0xff]
  %v63 = vadd.f32 %v52, %v61
  %v64 = vadd.f32 %v54, %v62
  %v65 = vadd.f32 %v57, %v61
  %v66 = vadd.f32 %v59, %v62
  %v67 = vld [vmem:[%s1] sm:$0xff]
  %v68 = vld [vmem:[%s1 + $0x30] sm:$0xff]
  %v69 = vld [vmem:[%s1 + $0x60] sm:$0xff]
  %v70 = vld [vmem:[%s1 + $0x90] sm:$0xff]
  %v71 = vpack.c.bf16 %v64, %v63
  %v72 = vpack.c.bf16 %v66, %v65
  %v73 = vpack.c.bf16 %v68, %v67
  %v74 = vpack.c.bf16 %v70, %v69
  %v75 = vld [vmem:[%s3] sm:$0x1]
  %v76 = vperm.slane %v75, 0
  %vm77 = vcmask 261120
  %v79 = vsel %vm77, %v71, 0
  %v82 = vsel %vm77, %v72, 0
  %84 = vmatpush.bf16.msra.mxu0 0
  %85 = vmatpush.bf16.msra.mxu0 0
  %86 = vmatpush.bf16.msra.mxu0 0
  %87 = vmatpush.bf16.msra.mxu0 0
  %88 = vmatpush.bf16.msra.mxu0 0
  %89 = vmatpush.bf16.msra.mxu0 0
  %90 = vmatpush.bf16.msra.mxu0 %v74
  %91 = vmatpush.bf16.msra.mxu0 %v73
  %92 = vmatmul.bf16.gmra.mxu0 %v79
  %v93 = vpop.f32.mrf.mxu0
  %v94 = vadd.f32 %v76, %v93
  %v95 = vpop.f32.mrf.mxu0
  %v96 = vadd.f32 %v76, %v95
  %97 = vmatmul.bf16.gmra.mxu0 %v82
  %v98 = vpop.f32.mrf.mxu0
  %v99 = vadd.f32 %v76, %v98
  %v100 = vpop.f32.mrf.mxu0
  %v101 = vadd.f32 %v76, %v100
  %102 = vdwg.mxu0
  %v103 = vpack.c.bf16 %v94, %v94
  %v104 = vpack.c.bf16 %v96, %v96
  %v105 = vpack.c.bf16 %v99, %v99
  %v106 = vpack.c.bf16 %v101, %v101
  %v109 = vunpack.c.l.b16 %v103
  %v110 = vunpack.c.l.b16 %v104
  %v111 = vpack.c.b16 %v110, %v109
  %112 = vrot.lane.b32.xlu0 %v111, 96
  %v113 = vpop.permute.xlu0 %112
  %vm114 = vcmask 130048
  %v116 = vsel %vm114, %v111, 0
  %v119 = vsel %vm114, %v113, 0
  %121 = vmatpush.bf16.xpose.msra.mxu0 0
  %122 = vmatpush.bf16.xpose.msra.mxu0 0
  %123 = vmatpush.bf16.xpose.msra.mxu0 0
  %124 = vmatpush.bf16.xpose.msra.mxu0 0
  %125 = vmatpush.bf16.xpose.msra.mxu0 0
  %126 = vmatpush.bf16.xpose.msra.mxu0 0
  %127 = vmatpush.bf16.xpose.msra.mxu0 0
  %128 = vmatpush.bf16.xpose.msra.mxu0 %v119
  %129 = vmatmul.bf16.gmra.mxu0 %v116
  %v130 = vpop.f32.mrf.mxu0
  %v131 = vadd.f32 0.0, %v130
  %v132 = vpop.f32.mrf.mxu0
  %v133 = vadd.f32 0.0, %v132
  %134 = vdwg.mxu0
  %v137 = vunpack.c.l.b16 %v105
  %v138 = vunpack.c.l.b16 %v106
  %v139 = vpack.c.b16 %v138, %v137
  %140 = vrot.lane.b32.xlu0 %v139, 96
  %v141 = vpop.permute.xlu0 %140
  %v143 = vsel %vm114, %v139, 0
  %v146 = vsel %vm114, %v141, 0
  %148 = vmatpush.bf16.xpose.msra.mxu0 0
  %149 = vmatpush.bf16.xpose.msra.mxu0 0
  %150 = vmatpush.bf16.xpose.msra.mxu0 0
  %151 = vmatpush.bf16.xpose.msra.mxu0 0
  %152 = vmatpush.bf16.xpose.msra.mxu0 0
  %153 = vmatpush.bf16.xpose.msra.mxu0 0
  %154 = vmatpush.bf16.xpose.msra.mxu0 0
  %155 = vmatpush.bf16.xpose.msra.mxu0 %v146
  %156 = vmatmul.bf16.gmra.mxu0 %v143
  %v157 = vpop.f32.mrf.mxu0
  %v158 = vadd.f32 0.0, %v157
  %v159 = vpop.f32.mrf.mxu0
  %v160 = vadd.f32 0.0, %v159
  %161 = vdwg.mxu0
  %v162 = vsel %vm114, %v131, -inf
  %163 = vmax.xlane.f32.xlu0 %v162
  %v164 = vpop.xlane.xlu0 %163
  %v165 = vsel %vm114, %v133, -inf
  %166 = vmax.xlane.f32.xlu0 %v165
  %v167 = vpop.xlane.xlu0 %166
  %v168 = vsel %vm114, %v158, -inf
  %169 = vmax.xlane.f32.xlu0 %v168
  %v170 = vpop.xlane.xlu0 %169
  %v171 = vsel %vm114, %v160, -inf
  %172 = vmax.xlane.f32.xlu0 %v171
  %v173 = vpop.xlane.xlu0 %172
  %v174 = vsub.f32 %v131, %v164
  %v175 = vsub.f32 %v133, %v167
  %v176 = vsub.f32 %v158, %v170
  %v177 = vsub.f32 %v160, %v173
  %v178 = vmul.f32 %v174, 1.442695
  %v179 = vpow.pop %v178
  %v180 = vmul.f32 %v175, 1.442695
  %v181 = vpow.pop %v180
  %v182 = vmul.f32 %v176, 1.442695
  %v183 = vpow.pop %v182
  %v184 = vmul.f32 %v177, 1.442695
  %v185 = vpow.pop %v184
  %v186 = vsel %vm114, %v179, 0.0
  %187 = vadd.xlane.f32.xlu0 %v186
  %v188 = vpop.xlane.xlu0 %187
  %v189 = vsel %vm114, %v181, 0.0
  %190 = vadd.xlane.f32.xlu0 %v189
  %v191 = vpop.xlane.xlu0 %190
  %v192 = vsel %vm114, %v183, 0.0
  %193 = vadd.xlane.f32.xlu0 %v192
  %v194 = vpop.xlane.xlu0 %193
  %v195 = vsel %vm114, %v185, 0.0
  %196 = vadd.xlane.f32.xlu0 %v195
  %v197 = vpop.xlane.xlu0 %196
  %v198 = vrcp.pop %v188
  %v199 = vrcp.pop %v191
  %v200 = vrcp.pop %v194
  %v201 = vrcp.pop %v197
  %v202 = vmul.f32 %v179, %v198
  %v203 = vmul.f32 %v181, %v199
  %v204 = vmul.f32 %v183, %v200
  %v205 = vmul.f32 %v185, %v201
  %v206 = vpack.c.bf16 %v202, %v202
  %v207 = vpack.c.bf16 %v203, %v203
  %v208 = vpack.c.bf16 %v204, %v204
  %v209 = vpack.c.bf16 %v205, %v205
  %v212 = vunpack.c.l.b16 %v206
  %v213 = vunpack.c.l.b16 %v207
  %v214 = vpack.c.b16 %v213, %v212
  %215 = vrot.lane.b32.xlu0 %v111, 64
  %v216 = vpop.permute.xlu0 %215
  %v219 = vsel %vm114, %v214, 0
  %221 = vmatpush.bf16.msra.mxu0 0
  %222 = vmatpush.bf16.msra.mxu0 0
  %223 = vmatpush.bf16.msra.mxu0 0
  %224 = vmatpush.bf16.msra.mxu0 0
  %225 = vmatpush.bf16.msra.mxu0 0
  %226 = vmatpush.bf16.msra.mxu0 0
  %227 = vmatpush.bf16.msra.mxu0 0
  %228 = vmatpush.bf16.msra.mxu0 %v216
  %229 = vmatmul.bf16.gmra.mxu0 %v219
  %v230 = vpop.f32.mrf.mxu0
  %v231 = vadd.f32 0.0, %v230
  %v232 = vpop.f32.mrf.mxu0
  %v233 = vadd.f32 0.0, %v232
  %234 = vdwg.mxu0
  %v237 = vunpack.c.l.b16 %v208
  %v238 = vunpack.c.l.b16 %v209
  %v239 = vpack.c.b16 %v238, %v237
  %240 = vrot.lane.b32.xlu0 %v139, 64
  %v241 = vpop.permute.xlu0 %240
  %v244 = vsel %vm114, %v239, 0
  %246 = vmatpush.bf16.msra.mxu0 0
  %247 = vmatpush.bf16.msra.mxu0 0
  %248 = vmatpush.bf16.msra.mxu0 0
  %249 = vmatpush.bf16.msra.mxu0 0
  %250 = vmatpush.bf16.msra.mxu0 0
  %251 = vmatpush.bf16.msra.mxu0 0
  %252 = vmatpush.bf16.msra.mxu0 0
  %253 = vmatpush.bf16.msra.mxu0 %v241
  %254 = vmatmul.bf16.gmra.mxu0 %v244
  %v255 = vpop.f32.mrf.mxu0
  %v256 = vadd.f32 0.0, %v255
  %v257 = vpop.f32.mrf.mxu0
  %v258 = vadd.f32 0.0, %v257
  %259 = vdwg.mxu0
  %260 = vst.msk [vmem:[#allocation2] sm:$0xff] %vm114, %v231
  %261 = vst.msk [vmem:[#allocation2 + $0x8] sm:$0xff] %vm114, %v233
  %262 = vst.msk [vmem:[#allocation2 + $0x10] sm:$0xff] %vm114, %v256
  %263 = vst.msk [vmem:[#allocation2 + $0x18] sm:$0xff] %vm114, %v258
  %264 = vrot.lane.b32.xlu0 %v111, 112
  %v265 = vpop.permute.xlu0 %264
  %266 = vrot.lane.b32.xlu0 %v111, 80
  %v267 = vpop.permute.xlu0 %266
  %v269 = vsel %vm114, %v265, 0
  %v272 = vsel %vm114, %v267, 0
  %274 = vmatpush.bf16.xpose.msra.mxu0 0
  %275 = vmatpush.bf16.xpose.msra.mxu0 0
  %276 = vmatpush.bf16.xpose.msra.mxu0 0
  %277 = vmatpush.bf16.xpose.msra.mxu0 0
  %278 = vmatpush.bf16.xpose.msra.mxu0 0
  %279 = vmatpush.bf16.xpose.msra.mxu0 0
  %280 = vmatpush.bf16.xpose.msra.mxu0 0
  %281 = vmatpush.bf16.xpose.msra.mxu0 %v272
  %282 = vmatmul.bf16.gmra.mxu0 %v269
  %v283 = vpop.f32.mrf.mxu0
  %v284 = vadd.f32 0.0, %v283
  %v285 = vpop.f32.mrf.mxu0
  %v286 = vadd.f32 0.0, %v285
  %287 = vdwg.mxu0
  %288 = vrot.lane.b32.xlu0 %v139, 112
  %v289 = vpop.permute.xlu0 %288
  %290 = vrot.lane.b32.xlu0 %v139, 80
  %v291 = vpop.permute.xlu0 %290
  %v293 = vsel %vm114, %v289, 0
  %v296 = vsel %vm114, %v291, 0
  %298 = vmatpush.bf16.xpose.msra.mxu0 0
  %299 = vmatpush.bf16.xpose.msra.mxu0 0
  %300 = vmatpush.bf16.xpose.msra.mxu0 0
  %301 = vmatpush.bf16.xpose.msra.mxu0 0
  %302 = vmatpush.bf16.xpose.msra.mxu0 0
  %303 = vmatpush.bf16.xpose.msra.mxu0 0
  %304 = vmatpush.bf16.xpose.msra.mxu0 0
  %305 = vmatpush.bf16.xpose.msra.mxu0 %v296
  %306 = vmatmul.bf16.gmra.mxu0 %v293
  %v307 = vpop.f32.mrf.mxu0
  %v308 = vadd.f32 0.0, %v307
  %v309 = vpop.f32.mrf.mxu0
  %v310 = vadd.f32 0.0, %v309
  %311 = vdwg.mxu0
  %v312 = vsel %vm114, %v284, -inf
  %313 = vmax.xlane.f32.xlu0 %v312
  %v314 = vpop.xlane.xlu0 %313
  %v315 = vsel %vm114, %v286, -inf
  %316 = vmax.xlane.f32.xlu0 %v315
  %v317 = vpop.xlane.xlu0 %316
  %v318 = vsel %vm114, %v308, -inf
  %319 = vmax.xlane.f32.xlu0 %v318
  %v320 = vpop.xlane.xlu0 %319
  %v321 = vsel %vm114, %v310, -inf
  %322 = vmax.xlane.f32.xlu0 %v321
  %v323 = vpop.xlane.xlu0 %322
  %v324 = vsub.f32 %v284, %v314
  %v325 = vsub.f32 %v286, %v317
  %v326 = vsub.f32 %v308, %v320
  %v327 = vsub.f32 %v310, %v323
  %v328 = vmul.f32 %v324, 1.442695
  %v329 = vpow.pop %v328
  %v330 = vmul.f32 %v325, 1.442695
  %v331 = vpow.pop %v330
  %v332 = vmul.f32 %v326, 1.442695
  %v333 = vpow.pop %v332
  %v334 = vmul.f32 %v327, 1.442695
  %v335 = vpow.pop %v334
  %v336 = vsel %vm114, %v329, 0.0
  %337 = vadd.xlane.f32.xlu0 %v336
  %v338 = vpop.xlane.xlu0 %337
  %v339 = vsel %vm114, %v331, 0.0
  %340 = vadd.xlane.f32.xlu0 %v339
  %v341 = vpop.xlane.xlu0 %340
  %v342 = vsel %vm114, %v333, 0.0
  %343 = vadd.xlane.f32.xlu0 %v342
  %v344 = vpop.xlane.xlu0 %343
  %v345 = vsel %vm114, %v335, 0.0
  %346 = vadd.xlane.f32.xlu0 %v345
  %v347 = vpop.xlane.xlu0 %346
  %v348 = vrcp.pop %v338
  %v349 = vrcp.pop %v341
  %v350 = vrcp.pop %v344
  %v351 = vrcp.pop %v347
  %v352 = vmul.f32 %v329, %v348
  %v353 = vmul.f32 %v331, %v349
  %v354 = vmul.f32 %v333, %v350
  %v355 = vmul.f32 %v335, %v351
  %v356 = vpack.c.bf16 %v352, %v352
  %v357 = vpack.c.bf16 %v353, %v353
  %v358 = vpack.c.bf16 %v354, %v354
  %v359 = vpack.c.bf16 %v355, %v355
  %v362 = vunpack.c.l.b16 %v356
  %v363 = vunpack.c.l.b16 %v357
  %v364 = vpack.c.b16 %v363, %v362
  %365 = vrot.lane.b32.xlu0 %v111, 48
  %v366 = vpop.permute.xlu0 %365
  %v369 = vsel %vm114, %v364, 0
  %371 = vmatpush.bf16.msra.mxu0 0
  %372 = vmatpush.bf16.msra.mxu0 0
  %373 = vmatpush.bf16.msra.mxu0 0
  %374 = vmatpush.bf16.msra.mxu0 0
  %375 = vmatpush.bf16.msra.mxu0 0
  %376 = vmatpush.bf16.msra.mxu0 0
  %377 = vmatpush.bf16.msra.mxu0 0
  %378 = vmatpush.bf16.msra.mxu0 %v366
  %379 = vmatmul.bf16.gmra.mxu0 %v369
  %v380 = vpop.f32.mrf.mxu0
  %v381 = vadd.f32 0.0, %v380
  %v382 = vpop.f32.mrf.mxu0
  %v383 = vadd.f32 0.0, %v382
  %384 = vdwg.mxu0
  %v387 = vunpack.c.l.b16 %v358
  %v388 = vunpack.c.l.b16 %v359
  %v389 = vpack.c.b16 %v388, %v387
  %390 = vrot.lane.b32.xlu0 %v139, 48
  %v391 = vpop.permute.xlu0 %390
  %v394 = vsel %vm114, %v389, 0
  %396 = vmatpush.bf16.msra.mxu0 0
  %397 = vmatpush.bf16.msra.mxu0 0
  %398 = vmatpush.bf16.msra.mxu0 0
  %399 = vmatpush.bf16.msra.mxu0 0
  %400 = vmatpush.bf16.msra.mxu0 0
  %401 = vmatpush.bf16.msra.mxu0 0
  %402 = vmatpush.bf16.msra.mxu0 0
  %403 = vmatpush.bf16.msra.mxu0 %v391
  %404 = vmatmul.bf16.gmra.mxu0 %v394
  %v405 = vpop.f32.mrf.mxu0
  %v406 = vadd.f32 0.0, %v405
  %v407 = vpop.f32.mrf.mxu0
  %v408 = vadd.f32 0.0, %v407
  %409 = vdwg.mxu0
  %414 = vrot.lane.b32.xlu0 %v381, 16
  %v415 = vpop.permute.xlu0 %414
  %416 = vrot.lane.b32.xlu0 %v383, 16
  %v417 = vpop.permute.xlu0 %416
  %418 = vrot.lane.b32.xlu0 %v406, 16
  %v419 = vpop.permute.xlu0 %418
  %420 = vrot.lane.b32.xlu0 %v408, 16
  %v421 = vpop.permute.xlu0 %420
  %vm426 = vcmask 261248
  %427 = vst.msk [vmem:[#allocation2] sm:$0xff] %vm426, %v415
  %428 = vst.msk [vmem:[#allocation2 + $0x8] sm:$0xff] %vm426, %v417
  %429 = vst.msk [vmem:[#allocation2 + $0x10] sm:$0xff] %vm426, %v419
  %430 = vst.msk [vmem:[#allocation2 + $0x18] sm:$0xff] %vm426, %v421
  %v431 = vld [vmem:[#allocation2] sm:$0xff]
  %v432 = vld [vmem:[#allocation2 + $0x8] sm:$0xff]
  %v433 = vld [vmem:[#allocation2 + $0x10] sm:$0xff]
  %v434 = vld [vmem:[#allocation2 + $0x18] sm:$0xff]
  %v435 = vld [vmem:[%s1] sm:$0xff]
  %v436 = vld [vmem:[%s1 + $0x30] sm:$0xff]
  %v437 = vld [vmem:[%s1 + $0x60] sm:$0xff]
  %v438 = vld [vmem:[%s1 + $0x90] sm:$0xff]
  %v439 = vpack.c.bf16 %v432, %v431
  %v440 = vpack.c.bf16 %v434, %v433
  %v441 = vpack.c.bf16 %v436, %v435
  %v442 = vpack.c.bf16 %v438, %v437
  %v443 = vld [vmem:[%s2 + $0x146] sm:$0x1]
  %v444 = vperm.slane %v443, 0
  %447 = vrot.lane.b32.xlu0 %v441, 32
  %v448 = vpop.permute.xlu0 %447
  %449 = vrot.lane.b32.xlu0 %v442, 32
  %v450 = vpop.permute.xlu0 %449
  %v454 = vsel %vm77, %v439, 0
  %v457 = vsel %vm77, %v440, 0
  %459 = vmatpush.bf16.msra.mxu0 0
  %460 = vmatpush.bf16.msra.mxu0 0
  %461 = vmatpush.bf16.msra.mxu0 0
  %462 = vmatpush.bf16.msra.mxu0 0
  %463 = vmatpush.bf16.msra.mxu0 0
  %464 = vmatpush.bf16.msra.mxu0 0
  %465 = vmatpush.bf16.msra.mxu0 %v450
  %466 = vmatpush.bf16.msra.mxu0 %v448
  %467 = vmatmul.bf16.gmra.mxu0 %v454
  %v468 = vpop.f32.mrf.mxu0
  %v469 = vadd.f32 %v444, %v468
  %v470 = vpop.f32.mrf.mxu0
  %v471 = vadd.f32 %v444, %v470
  %472 = vmatmul.bf16.gmra.mxu0 %v457
  %v473 = vpop.f32.mrf.mxu0
  %v474 = vadd.f32 %v444, %v473
  %v475 = vpop.f32.mrf.mxu0
  %v476 = vadd.f32 %v444, %v475
  %477 = vdwg.mxu0
  %v478 = vadd.f32 %v63, %v469
  %v479 = vadd.f32 %v64, %v471
  %v480 = vadd.f32 %v65, %v474
  %v481 = vadd.f32 %v66, %v476
  %v482 = vld [vmem:[%s2 + $0x148] sm:$0x1]
  %v483 = vld [vmem:[%s2 + $0x149] sm:$0x1]
  %v484 = vsel %vm77, %v478, 0.0
  %485 = vadd.xlane.f32.xlu0 %v484
  %v486 = vpop.xlane.xlu0 %485
  %v487 = vsel %vm77, %v479, 0.0
  %488 = vadd.xlane.f32.xlu0 %v487
  %v489 = vpop.xlane.xlu0 %488
  %v490 = vsel %vm77, %v480, 0.0
  %491 = vadd.xlane.f32.xlu0 %v490
  %v492 = vpop.xlane.xlu0 %491
  %v493 = vsel %vm77, %v481, 0.0
  %494 = vadd.xlane.f32.xlu0 %v493
  %v495 = vpop.xlane.xlu0 %494
  %v496 = vrcp.pop 32.0
  %v497 = vmul.f32 32.0, %v496
  %v498 = vsub.f32 1.0, %v497
  %v499 = vmul.f32 %v496, %v498
  %v500 = vadd.f32 %v496, %v499
  %vm501 = vweird.f32 %v496
  %v502 = vsel %vm501, %v496, %v500
  %v503 = vmul.f32 %v486, %v502
  %v504 = vmul.f32 %v489, %v502
  %v505 = vmul.f32 %v492, %v502
  %v506 = vmul.f32 %v495, %v502
  %v507 = vsub.f32 %v478, %v503
  %v508 = vsub.f32 %v479, %v504
  %v509 = vsub.f32 %v480, %v505
  %v510 = vsub.f32 %v481, %v506
  %v511 = vmul.f32 %v507, %v507
  %v512 = vmul.f32 %v508, %v508
  %v513 = vmul.f32 %v509, %v509
  %v514 = vmul.f32 %v510, %v510
  %v515 = vsel %vm77, %v511, 0.0
  %516 = vadd.xlane.f32.xlu0 %v515
  %v517 = vpop.xlane.xlu0 %516
  %v518 = vsel %vm77, %v512, 0.0
  %519 = vadd.xlane.f32.xlu0 %v518
  %v520 = vpop.xlane.xlu0 %519
  %v521 = vsel %vm77, %v513, 0.0
  %522 = vadd.xlane.f32.xlu0 %v521
  %v523 = vpop.xlane.xlu0 %522
  %v524 = vsel %vm77, %v514, 0.0
  %525 = vadd.xlane.f32.xlu0 %v524
  %v526 = vpop.xlane.xlu0 %525
  %v527 = vmul.f32 %v517, %v502
  %v528 = vmul.f32 %v520, %v502
  %v529 = vmul.f32 %v523, %v502
  %v530 = vmul.f32 %v526, %v502
  %v531 = vadd.f32 %v527, 1e-05
  %v532 = vadd.f32 %v528, 1e-05
  %v533 = vadd.f32 %v529, 1e-05
  %v534 = vadd.f32 %v530, 1e-05
  %v535 = vrsqrt.pop %v531
  %v536 = vmul.f32 %v535, %v531
  %v537 = vmul.f32 %v536, %v535
  %v538 = vmul.f32 0.5, %v537
  %v539 = vsub.f32 1.5, %v538
  %v540 = vmul.f32 %v535, %v539
  %vm541 = vweird.f32 %v531
  %vm542 = vweird.f32 %v535
  %vm543 = vmor %vm541, %vm542
  %v544 = vsel %vm543, %v535, %v540
  %v545 = vrsqrt.pop %v532
  %v546 = vmul.f32 %v545, %v532
  %v547 = vmul.f32 %v546, %v545
  %v548 = vmul.f32 0.5, %v547
  %v549 = vsub.f32 1.5, %v548
  %v550 = vmul.f32 %v545, %v549
  %vm551 = vweird.f32 %v532
  %vm552 = vweird.f32 %v545
  %vm553 = vmor %vm551, %vm552
  %v554 = vsel %vm553, %v545, %v550
  %v555 = vrsqrt.pop %v533
  %v556 = vmul.f32 %v555, %v533
  %v557 = vmul.f32 %v556, %v555
  %v558 = vmul.f32 0.5, %v557
  %v559 = vsub.f32 1.5, %v558
  %v560 = vmul.f32 %v555, %v559
  %vm561 = vweird.f32 %v533
  %vm562 = vweird.f32 %v555
  %vm563 = vmor %vm561, %vm562
  %v564 = vsel %vm563, %v555, %v560
  %v565 = vrsqrt.pop %v534
  %v566 = vmul.f32 %v565, %v534
  %v567 = vmul.f32 %v566, %v565
  %v568 = vmul.f32 0.5, %v567
  %v569 = vsub.f32 1.5, %v568
  %v570 = vmul.f32 %v565, %v569
  %vm571 = vweird.f32 %v534
  %vm572 = vweird.f32 %v565
  %vm573 = vmor %vm571, %vm572
  %v574 = vsel %vm573, %v565, %v570
  %v575 = vmul.f32 %v507, %v544
  %v576 = vmul.f32 %v508, %v554
  %v577 = vmul.f32 %v509, %v564
  %v578 = vmul.f32 %v510, %v574
  %v579 = vperm.slane %v482, 0
  %v580 = vmul.f32 %v575, %v579
  %v581 = vmul.f32 %v576, %v579
  %v582 = vmul.f32 %v577, %v579
  %v583 = vmul.f32 %v578, %v579
  %v584 = vperm.slane %v483, 0
  %v585 = vadd.f32 %v580, %v584
  %v586 = vadd.f32 %v581, %v584
  %v587 = vadd.f32 %v582, %v584
  %v588 = vadd.f32 %v583, %v584
  %v589 = vld [vmem:[%s1 + $0x8] sm:$0xff]
  %v590 = vld [vmem:[%s1 + $0x38] sm:$0xff]
  %v591 = vld [vmem:[%s1 + $0x68] sm:$0xff]
  %v592 = vld [vmem:[%s1 + $0x98] sm:$0xff]
  %v593 = vpack.c.bf16 %v586, %v585
  %v594 = vpack.c.bf16 %v588, %v587
  %v595 = vpack.c.bf16 %v590, %v589
  %v596 = vpack.c.bf16 %v592, %v591
  %v597 = vld [vmem:[%s3 + $0x1] sm:$0x1]
  %v598 = vperm.slane %v597, 0
  %v600 = vsel %vm77, %v593, 0
  %v603 = vsel %vm77, %v594, 0
  %605 = vmatpush.bf16.msra.mxu0 0
  %606 = vmatpush.bf16.msra.mxu0 0
  %607 = vmatpush.bf16.msra.mxu0 0
  %608 = vmatpush.bf16.msra.mxu0 0
  %609 = vmatpush.bf16.msra.mxu0 0
  %610 = vmatpush.bf16.msra.mxu0 0
  %611 = vmatpush.bf16.msra.mxu0 %v596
  %612 = vmatpush.bf16.msra.mxu0 %v595
  %613 = vmatmul.bf16.gmra.mxu0 %v600
  %v614 = vpop.f32.mrf.mxu0
  %v615 = vadd.f32 %v598, %v614
  %v616 = vpop.f32.mrf.mxu0
  %v617 = vadd.f32 %v598, %v616
  %618 = vmatmul.bf16.gmra.mxu0 %v603
  %v619 = vpop.f32.mrf.mxu0
  %v620 = vadd.f32 %v598, %v619
  %v621 = vpop.f32.mrf.mxu0
  %v622 = vadd.f32 %v598, %v621
  %623 = vdwg.mxu0
  %v624 = vmul.f32 %v615, 0.5
  %v625 = vmul.f32 %v617, 0.5
  %v626 = vmul.f32 %v620, 0.5
  %v627 = vmul.f32 %v622, 0.5
  %v628 = vmul.f32 %v615, 0.044715
  %v629 = vmul.f32 %v617, 0.044715
  %v630 = vmul.f32 %v620, 0.044715
  %v631 = vmul.f32 %v622, 0.044715
  %v632 = vmul.f32 %v628, %v615
  %v633 = vmul.f32 %v629, %v617
  %v634 = vmul.f32 %v630, %v620
  %v635 = vmul.f32 %v631, %v622
  %v636 = vmul.f32 %v632, %v615
  %v637 = vmul.f32 %v633, %v617
  %v638 = vmul.f32 %v634, %v620
  %v639 = vmul.f32 %v635, %v622
  %v640 = vadd.f32 %v615, %v636
  %v641 = vadd.f32 %v617, %v637
  %v642 = vadd.f32 %v620, %v638
  %v643 = vadd.f32 %v622, %v639
  %v644 = vmul.f32 %v640, 0.7978846
  %v645 = vmul.f32 %v641, 0.7978846
  %v646 = vmul.f32 %v642, 0.7978846
  %v647 = vmul.f32 %v643, 0.7978846
  %v648 = vtanh.pop %v644
  %v649 = vtanh.pop %v645
  %v650 = vtanh.pop %v646
  %v651 = vtanh.pop %v647
  %v652 = vadd.f32 %v648, 1.0
  %v653 = vadd.f32 %v649, 1.0
  %v654 = vadd.f32 %v650, 1.0
  %v655 = vadd.f32 %v651, 1.0
  %v656 = vmul.f32 %v624, %v652
  %v657 = vmul.f32 %v625, %v653
  %v658 = vmul.f32 %v626, %v654
  %v659 = vmul.f32 %v627, %v655
  %v660 = vld [vmem:[%s2 + $0x41] sm:$0xff]
  %v661 = vld [vmem:[%s2 + $0x49] sm:$0xff]
  %v662 = vld [vmem:[%s2 + $0x51] sm:$0xff]
  %v663 = vld [vmem:[%s2 + $0x59] sm:$0xff]
  %v664 = vld [vmem:[%s2 + $0x61] sm:$0xff]
  %v665 = vld [vmem:[%s2 + $0x69] sm:$0xff]
  %v666 = vld [vmem:[%s2 + $0x71] sm:$0xff]
  %v667 = vld [vmem:[%s2 + $0x79] sm:$0xff]
  %v668 = vld [vmem:[%s2 + $0x81] sm:$0xff]
  %v669 = vld [vmem:[%s2 + $0x89] sm:$0xff]
  %v670 = vld [vmem:[%s2 + $0x91] sm:$0xff]
  %v671 = vld [vmem:[%s2 + $0x99] sm:$0xff]
  %v672 = vld [vmem:[%s2 + $0xa1] sm:$0xff]
  %v673 = vld [vmem:[%s2 + $0xa9] sm:$0xff]
  %v674 = vld [vmem:[%s2 + $0xb1] sm:$0xff]
  %v675 = vld [vmem:[%s2 + $0xb9] sm:$0xff]
  %v676 = vpack.c.bf16 %v657, %v656
  %v677 = vpack.c.bf16 %v659, %v658
  %v678 = vpack.c.bf16 %v661, %v660
  %v679 = vpack.c.bf16 %v663, %v662
  %v680 = vpack.c.bf16 %v665, %v664
  %v681 = vpack.c.bf16 %v667, %v666
  %v682 = vpack.c.bf16 %v669, %v668
  %v683 = vpack.c.bf16 %v671, %v670
  %v684 = vpack.c.bf16 %v673, %v672
  %v685 = vpack.c.bf16 %v675, %v674
  %v686 = vld [vmem:[%s2 + $0x147] sm:$0x1]
  %v687 = vperm.slane %v686, 0
  %688 = vmatpush.bf16.msra.mxu0 %v685
  %689 = vmatpush.bf16.msra.mxu0 %v684
  %690 = vmatpush.bf16.msra.mxu0 %v683
  %691 = vmatpush.bf16.msra.mxu0 %v682
  %692 = vmatpush.bf16.msra.mxu0 %v681
  %693 = vmatpush.bf16.msra.mxu0 %v680
  %694 = vmatpush.bf16.msra.mxu0 %v679
  %695 = vmatpush.bf16.msra.mxu0 %v678
  %696 = vmatmul.bf16.gmra.mxu0 %v676
  %v697 = vpop.f32.mrf.mxu0
  %v698 = vadd.f32 %v687, %v697
  %v699 = vpop.f32.mrf.mxu0
  %v700 = vadd.f32 %v687, %v699
  %701 = vmatmul.bf16.gmra.mxu0 %v677
  %v702 = vpop.f32.mrf.mxu0
  %v703 = vadd.f32 %v687, %v702
  %v704 = vpop.f32.mrf.mxu0
  %v705 = vadd.f32 %v687, %v704
  %706 = vdwg.mxu0
  %v707 = vadd.f32 %v585, %v698
  %v708 = vadd.f32 %v586, %v700
  %v709 = vadd.f32 %v587, %v703
  %v710 = vadd.f32 %v588, %v705
  %v711 = vld [vmem:[%s2 + $0x14a] sm:$0x1]
  %v712 = vld [vmem:[%s2 + $0x14b] sm:$0x1]
  %v713 = vsel %vm77, %v707, 0.0
  %714 = vadd.xlane.f32.xlu0 %v713
  %v715 = vpop.xlane.xlu0 %714
  %v716 = vsel %vm77, %v708, 0.0
  %717 = vadd.xlane.f32.xlu0 %v716
  %v718 = vpop.xlane.xlu0 %717
  %v719 = vsel %vm77, %v709, 0.0
  %720 = vadd.xlane.f32.xlu0 %v719
  %v721 = vpop.xlane.xlu0 %720
  %v722 = vsel %vm77, %v710, 0.0
  %723 = vadd.xlane.f32.xlu0 %v722
  %v724 = vpop.xlane.xlu0 %723
  %v725 = vmul.f32 %v715, %v502
  %v726 = vmul.f32 %v718, %v502
  %v727 = vmul.f32 %v721, %v502
  %v728 = vmul.f32 %v724, %v502
  %v729 = vsub.f32 %v707, %v725
  %v730 = vsub.f32 %v708, %v726
  %v731 = vsub.f32 %v709, %v727
  %v732 = vsub.f32 %v710, %v728
  %v733 = vmul.f32 %v729, %v729
  %v734 = vmul.f32 %v730, %v730
  %v735 = vmul.f32 %v731, %v731
  %v736 = vmul.f32 %v732, %v732
  %v737 = vsel %vm77, %v733, 0.0
  %738 = vadd.xlane.f32.xlu0 %v737
  %v739 = vpop.xlane.xlu0 %738
  %v740 = vsel %vm77, %v734, 0.0
  %741 = vadd.xlane.f32.xlu0 %v740
  %v742 = vpop.xlane.xlu0 %741
  %v743 = vsel %vm77, %v735, 0.0
  %744 = vadd.xlane.f32.xlu0 %v743
  %v745 = vpop.xlane.xlu0 %744
  %v746 = vsel %vm77, %v736, 0.0
  %747 = vadd.xlane.f32.xlu0 %v746
  %v748 = vpop.xlane.xlu0 %747
  %v749 = vmul.f32 %v739, %v502
  %v750 = vmul.f32 %v742, %v502
  %v751 = vmul.f32 %v745, %v502
  %v752 = vmul.f32 %v748, %v502
  %v753 = vadd.f32 %v749, 1e-05
  %v754 = vadd.f32 %v750, 1e-05
  %v755 = vadd.f32 %v751, 1e-05
  %v756 = vadd.f32 %v752, 1e-05
  %v757 = vrsqrt.pop %v753
  %v758 = vmul.f32 %v757, %v753
  %v759 = vmul.f32 %v758, %v757
  %v760 = vmul.f32 0.5, %v759
  %v761 = vsub.f32 1.5, %v760
  %v762 = vmul.f32 %v757, %v761
  %vm763 = vweird.f32 %v753
  %vm764 = vweird.f32 %v757
  %vm765 = vmor %vm763, %vm764
  %v766 = vsel %vm765, %v757, %v762
  %v767 = vrsqrt.pop %v754
  %v768 = vmul.f32 %v767, %v754
  %v769 = vmul.f32 %v768, %v767
  %v770 = vmul.f32 0.5, %v769
  %v771 = vsub.f32 1.5, %v770
  %v772 = vmul.f32 %v767, %v771
  %vm773 = vweird.f32 %v754
  %vm774 = vweird.f32 %v767
  %vm775 = vmor %vm773, %vm774
  %v776 = vsel %vm775, %v767, %v772
  %v777 = vrsqrt.pop %v755
  %v778 = vmul.f32 %v777, %v755
  %v779 = vmul.f32 %v778, %v777
  %v780 = vmul.f32 0.5, %v779
  %v781 = vsub.f32 1.5, %v780
  %v782 = vmul.f32 %v777, %v781
  %vm783 = vweird.f32 %v755
  %vm784 = vweird.f32 %v777
  %vm785 = vmor %vm783, %vm784
  %v786 = vsel %vm785, %v777, %v782
  %v787 = vrsqrt.pop %v756
  %v788 = vmul.f32 %v787, %v756
  %v789 = vmul.f32 %v788, %v787
  %v790 = vmul.f32 0.5, %v789
  %v791 = vsub.f32 1.5, %v790
  %v792 = vmul.f32 %v787, %v791
  %vm793 = vweird.f32 %v756
  %vm794 = vweird.f32 %v787
  %vm795 = vmor %vm793, %vm794
  %v796 = vsel %vm795, %v787, %v792
  %v797 = vmul.f32 %v729, %v766
  %v798 = vmul.f32 %v730, %v776
  %v799 = vmul.f32 %v731, %v786
  %v800 = vmul.f32 %v732, %v796
  %v801 = vperm.slane %v711, 0
  %v802 = vmul.f32 %v797, %v801
  %v803 = vmul.f32 %v798, %v801
  %v804 = vmul.f32 %v799, %v801
  %v805 = vmul.f32 %v800, %v801
  %v806 = vperm.slane %v712, 0
  %v807 = vadd.f32 %v802, %v806
  %v808 = vadd.f32 %v803, %v806
  %v809 = vadd.f32 %v804, %v806
  %v810 = vadd.f32 %v805, %v806
  %v811 = vld [vmem:[%s2 + $0x14c] sm:$0x1]
  %v812 = vld [vmem:[%s2 + $0x14d] sm:$0x1]
  %v813 = vsel %vm77, %v807, 0.0
  %814 = vadd.xlane.f32.xlu0 %v813
  %v815 = vpop.xlane.xlu0 %814
  %v816 = vsel %vm77, %v808, 0.0
  %817 = vadd.xlane.f32.xlu0 %v816
  %v818 = vpop.xlane.xlu0 %817
  %v819 = vsel %vm77, %v809, 0.0
  %820 = vadd.xlane.f32.xlu0 %v819
  %v821 = vpop.xlane.xlu0 %820
  %v822 = vsel %vm77, %v810, 0.0
  %823 = vadd.xlane.f32.xlu0 %v822
  %v824 = vpop.xlane.xlu0 %823
  %v825 = vmul.f32 %v815, %v502
  %v826 = vmul.f32 %v818, %v502
  %v827 = vmul.f32 %v821, %v502
  %v828 = vmul.f32 %v824, %v502
  %v829 = vsub.f32 %v807, %v825
  %v830 = vsub.f32 %v808, %v826
  %v831 = vsub.f32 %v809, %v827
  %v832 = vsub.f32 %v810, %v828
  %v833 = vmul.f32 %v829, %v829
  %v834 = vmul.f32 %v830, %v830
  %v835 = vmul.f32 %v831, %v831
  %v836 = vmul.f32 %v832, %v832
  %v837 = vsel %vm77, %v833, 0.0
  %838 = vadd.xlane.f32.xlu0 %v837
  %v839 = vpop.xlane.xlu0 %838
  %v840 = vsel %vm77, %v834, 0.0
  %841 = vadd.xlane.f32.xlu0 %v840
  %v842 = vpop.xlane.xlu0 %841
  %v843 = vsel %vm77, %v835, 0.0
  %844 = vadd.xlane.f32.xlu0 %v843
  %v845 = vpop.xlane.xlu0 %844
  %v846 = vsel %vm77, %v836, 0.0
  %847 = vadd.xlane.f32.xlu0 %v846
  %v848 = vpop.xlane.xlu0 %847
  %v849 = vmul.f32 %v839, %v502
  %v850 = vmul.f32 %v842, %v502
  %v851 = vmul.f32 %v845, %v502
  %v852 = vmul.f32 %v848, %v502
  %v853 = vadd.f32 %v849, 1e-05
  %v854 = vadd.f32 %v850, 1e-05
  %v855 = vadd.f32 %v851, 1e-05
  %v856 = vadd.f32 %v852, 1e-05
  %v857 = vrsqrt.pop %v853
  %v858 = vmul.f32 %v857, %v853
  %v859 = vmul.f32 %v858, %v857
  %v860 = vmul.f32 0.5, %v859
  %v861 = vsub.f32 1.5, %v860
  %v862 = vmul.f32 %v857, %v861
  %vm863 = vweird.f32 %v853
  %vm864 = vweird.f32 %v857
  %vm865 = vmor %vm863, %vm864
  %v866 = vsel %vm865, %v857, %v862
  %v867 = vrsqrt.pop %v854
  %v868 = vmul.f32 %v867, %v854
  %v869 = vmul.f32 %v868, %v867
  %v870 = vmul.f32 0.5, %v869
  %v871 = vsub.f32 1.5, %v870
  %v872 = vmul.f32 %v867, %v871
  %vm873 = vweird.f32 %v854
  %vm874 = vweird.f32 %v867
  %vm875 = vmor %vm873, %vm874
  %v876 = vsel %vm875, %v867, %v872
  %v877 = vrsqrt.pop %v855
  %v878 = vmul.f32 %v877, %v855
  %v879 = vmul.f32 %v878, %v877
  %v880 = vmul.f32 0.5, %v879
  %v881 = vsub.f32 1.5, %v880
  %v882 = vmul.f32 %v877, %v881
  %vm883 = vweird.f32 %v855
  %vm884 = vweird.f32 %v877
  %vm885 = vmor %vm883, %vm884
  %v886 = vsel %vm885, %v877, %v882
  %v887 = vrsqrt.pop %v856
  %v888 = vmul.f32 %v887, %v856
  %v889 = vmul.f32 %v888, %v887
  %v890 = vmul.f32 0.5, %v889
  %v891 = vsub.f32 1.5, %v890
  %v892 = vmul.f32 %v887, %v891
  %vm893 = vweird.f32 %v856
  %vm894 = vweird.f32 %v887
  %vm895 = vmor %vm893, %vm894
  %v896 = vsel %vm895, %v887, %v892
  %v897 = vmul.f32 %v829, %v866
  %v898 = vmul.f32 %v830, %v876
  %v899 = vmul.f32 %v831, %v886
  %v900 = vmul.f32 %v832, %v896
  %v901 = vperm.slane %v811, 0
  %v902 = vmul.f32 %v897, %v901
  %v903 = vmul.f32 %v898, %v901
  %v904 = vmul.f32 %v899, %v901
  %v905 = vmul.f32 %v900, %v901
  %v906 = vperm.slane %v812, 0
  %v907 = vadd.f32 %v902, %v906
  %v908 = vadd.f32 %v903, %v906
  %v909 = vadd.f32 %v904, %v906
  %v910 = vadd.f32 %v905, %v906
  %v911 = vld [vmem:[%s2 + $0x40] sm:$0x1]
  %v912 = vld [vmem:[%s1 + $0x10] sm:$0xff]
  %v913 = vld [vmem:[%s1 + $0x40] sm:$0xff]
  %v914 = vld [vmem:[%s1 + $0x70] sm:$0xff]
  %v915 = vld [vmem:[%s1 + $0xa0] sm:$0xff]
  %v916 = vpack.c.bf16 %v911, %v911
  %v917 = vpack.c.bf16 %v913, %v912
  %v918 = vpack.c.bf16 %v915, %v914
  %v919 = vld [vmem:[%s2 + $0x14e] sm:$0x1]
  %v920 = vperm.slane %v919, 0
  %v922 = vunpack.c.l.b16 %v916
  %v923 = vrot.slane %v922, 7
  %vm924 = vcmask 1041409
  %v925 = vsel %vm924, %v923, %v922
  %v926 = vpack.c.b16 %v925, %v925
  %v928 = vsel %vm77, %v926, 0
  %930 = vmatpush.bf16.msra.mxu0 0
  %931 = vmatpush.bf16.msra.mxu0 0
  %932 = vmatpush.bf16.msra.mxu0 0
  %933 = vmatpush.bf16.msra.mxu0 0
  %934 = vmatpush.bf16.msra.mxu0 0
  %935 = vmatpush.bf16.msra.mxu0 0
  %936 = vmatpush.bf16.msra.mxu0 %v918
  %937 = vmatpush.bf16.msra.mxu0 %v917
  %938 = vmatmul.bf16.gmra.mxu0 %v928
  %v939 = vpop.f32.mrf.mxu0
  %v940 = vadd.f32 %v920, %v939
  %v941 = vpop.f32.mrf.mxu0
  %942 = vdwg.mxu0
  %v944 = vrot.slane %v940, 1
  %v947 = vadd.f32 %v911, %v940
  %v948 = vadd.f32 %v911, %v944
  %v949 = vld [vmem:[%s2 + $0x152] sm:$0x1]
  %v950 = vld [vmem:[%s2 + $0x153] sm:$0x1]
  %v953 = vrot.slane %v948, 7
  %v954 = vsel %vm924, %v953, %v947
  %vm956 = vcmask 254976
  %v957 = vsel %vm956, %v954, 0.0
  %958 = vadd.xlane.f32.xlu0 %v957
  %v959 = vpop.xlane.xlu0 %958
  %v960 = vmul.f32 %v959, %v502
  %v962 = vrot.slane %v960, 1
  %v965 = vsub.f32 %v947, %v960
  %v966 = vsub.f32 %v948, %v962
  %v967 = vmul.f32 %v965, %v965
  %v968 = vmul.f32 %v966, %v966
  %v971 = vrot.slane %v968, 7
  %v972 = vsel %vm924, %v971, %v967
  %v974 = vsel %vm956, %v972, 0.0
  %975 = vadd.xlane.f32.xlu0 %v974
  %v976 = vpop.xlane.xlu0 %975
  %v977 = vmul.f32 %v976, %v502
  %v978 = vadd.f32 %v977, 1e-05
  %v979 = vrsqrt.pop %v978
  %v980 = vmul.f32 %v979, %v978
  %v981 = vmul.f32 %v980, %v979
  %v982 = vmul.f32 0.5, %v981
  %v983 = vsub.f32 1.5, %v982
  %v984 = vmul.f32 %v979, %v983
  %vm985 = vweird.f32 %v978
  %vm986 = vweird.f32 %v979
  %vm987 = vmor %vm985, %vm986
  %v988 = vsel %vm987, %v979, %v984
  %v990 = vrot.slane %v988, 1
  %v993 = vmul.f32 %v965, %v988
  %v994 = vmul.f32 %v966, %v990
  %v995 = vperm.slane %v949, 0
  %v996 = vmul.f32 %v993, %v995
  %v997 = vmul.f32 %v994, %v995
  %v998 = vperm.slane %v950, 0
  %v999 = vadd.f32 %v996, %v998
  %v1000 = vadd.f32 %v997, %v998
  %v1001 = vpack.c.bf16 %v999, %v999
  %v1002 = vpack.c.bf16 %v1000, %v1000
  %v1003 = vld [vmem:[%s2 + $0x14f] sm:$0x1]
  %v1004 = vperm.slane %v1003, 0
  %v1007 = vunpack.c.l.b16 %v1001
  %v1008 = vunpack.c.l.b16 %v1002
  %v1009 = vrot.slane %v1008, 7
  %v1010 = vsel %vm924, %v1009, %v1007
  %v1011 = vpack.c.b16 %v1010, %v1010
  %1014 = vrot.lane.b32.xlu0 %v917, 96
  %v1015 = vpop.permute.xlu0 %1014
  %1016 = vrot.lane.b32.xlu0 %v918, 96
  %v1017 = vpop.permute.xlu0 %1016
  %v1021 = vsel %vm77, %v1011, 0
  %1023 = vmatpush.bf16.msra.mxu0 0
  %1024 = vmatpush.bf16.msra.mxu0 0
  %1025 = vmatpush.bf16.msra.mxu0 0
  %1026 = vmatpush.bf16.msra.mxu0 0
  %1027 = vmatpush.bf16.msra.mxu0 0
  %1028 = vmatpush.bf16.msra.mxu0 0
  %1029 = vmatpush.bf16.msra.mxu0 %v1017
  %1030 = vmatpush.bf16.msra.mxu0 %v1015
  %1031 = vmatmul.bf16.gmra.mxu0 %v1021
  %v1032 = vpop.f32.mrf.mxu0
  %v1033 = vadd.f32 %v1004, %v1032
  %v1034 = vpop.f32.mrf.mxu0
  %1035 = vdwg.mxu0
  %v1036 = vpack.c.bf16 %v908, %v907
  %v1037 = vpack.c.bf16 %v910, %v909
  %v1038 = vld [vmem:[%s3 + $0x2] sm:$0x1]
  %v1039 = vperm.slane %v1038, 0
  %1040 = vrot.lane.b32.xlu0 %v917, 64
  %v1041 = vpop.permute.xlu0 %1040
  %1042 = vrot.lane.b32.xlu0 %v918, 64
  %v1043 = vpop.permute.xlu0 %1042
  %v1047 = vsel %vm77, %v1036, 0
  %v1050 = vsel %vm77, %v1037, 0
  %1052 = vmatpush.bf16.msra.mxu0 0
  %1053 = vmatpush.bf16.msra.mxu0 0
  %1054 = vmatpush.bf16.msra.mxu0 0
  %1055 = vmatpush.bf16.msra.mxu0 0
  %1056 = vmatpush.bf16.msra.mxu0 0
  %1057 = vmatpush.bf16.msra.mxu0 0
  %1058 = vmatpush.bf16.msra.mxu0 %v1043
  %1059 = vmatpush.bf16.msra.mxu0 %v1041
  %1060 = vmatmul.bf16.gmra.mxu0 %v1047
  %v1061 = vpop.f32.mrf.mxu0
  %v1062 = vadd.f32 %v1039, %v1061
  %v1063 = vpop.f32.mrf.mxu0
  %v1064 = vadd.f32 %v1039, %v1063
  %1065 = vmatmul.bf16.gmra.mxu0 %v1050
  %v1066 = vpop.f32.mrf.mxu0
  %v1067 = vadd.f32 %v1039, %v1066
  %v1068 = vpop.f32.mrf.mxu0
  %v1069 = vadd.f32 %v1039, %v1068
  %1070 = vdwg.mxu0
  %v1072 = vrot.slane %v1033, 1
  %v1074 = vpack.c.bf16 %v1033, %v1033
  %v1075 = vpack.c.bf16 %v1072, %v1072
  %v1076 = vpack.c.bf16 %v1062, %v1062
  %v1077 = vpack.c.bf16 %v1064, %v1064
  %v1078 = vpack.c.bf16 %v1067, %v1067
  %v1079 = vpack.c.bf16 %v1069, %v1069
  %v1082 = vunpack.c.l.b16 %v1076
  %v1083 = vunpack.c.l.b16 %v1077
  %v1084 = vpack.c.b16 %v1083, %v1082
  %v1086 = vsel %vm114, %v1074, 0
  %v1089 = vsel %vm114, %v1084, 0
  %1091 = vmatpush.bf16.xpose.msra.mxu0 0
  %1092 = vmatpush.bf16.xpose.msra.mxu0 0
  %1093 = vmatpush.bf16.xpose.msra.mxu0 0
  %1094 = vmatpush.bf16.xpose.msra.mxu0 0
  %1095 = vmatpush.bf16.xpose.msra.mxu0 0
  %1096 = vmatpush.bf16.xpose.msra.mxu0 0
  %1097 = vmatpush.bf16.xpose.msra.mxu0 0
  %1098 = vmatpush.bf16.xpose.msra.mxu0 %v1089
  %1099 = vmatmul.bf16.gmra.mxu0 %v1086
  %v1100 = vpop.f32.mrf.mxu0
  %v1101 = vadd.f32 0.0, %v1100
  %v1102 = vpop.f32.mrf.mxu0
  %1103 = vdwg.mxu0
  %v1106 = vunpack.c.l.b16 %v1078
  %v1107 = vunpack.c.l.b16 %v1079
  %v1108 = vpack.c.b16 %v1107, %v1106
  %v1110 = vsel %vm114, %v1075, 0
  %v1113 = vsel %vm114, %v1108, 0
  %1115 = vmatpush.bf16.xpose.msra.mxu0 0
  %1116 = vmatpush.bf16.xpose.msra.mxu0 0
  %1117 = vmatpush.bf16.xpose.msra.mxu0 0
  %1118 = vmatpush.bf16.xpose.msra.mxu0 0
  %1119 = vmatpush.bf16.xpose.msra.mxu0 0
  %1120 = vmatpush.bf16.xpose.msra.mxu0 0
  %1121 = vmatpush.bf16.xpose.msra.mxu0 0
  %1122 = vmatpush.bf16.xpose.msra.mxu0 %v1113
  %1123 = vmatmul.bf16.gmra.mxu0 %v1110
  %v1124 = vpop.f32.mrf.mxu0
  %v1125 = vadd.f32 0.0, %v1124
  %v1126 = vpop.f32.mrf.mxu0
  %1127 = vdwg.mxu0
  %vm1128 = vcmask 122880
  %v1129 = vsel %vm1128, %v1101, -inf
  %1130 = vmax.xlane.f32.xlu0 %v1129
  %v1131 = vpop.xlane.xlu0 %1130
  %v1132 = vsel %vm1128, %v1125, -inf
  %1133 = vmax.xlane.f32.xlu0 %v1132
  %v1134 = vpop.xlane.xlu0 %1133
  %v1135 = vsub.f32 %v1101, %v1131
  %v1136 = vsub.f32 %v1125, %v1134
  %v1137 = vmul.f32 %v1135, 1.442695
  %v1138 = vpow.pop %v1137
  %v1139 = vmul.f32 %v1136, 1.442695
  %v1140 = vpow.pop %v1139
  %v1141 = vsel %vm1128, %v1138, 0.0
  %1142 = vadd.xlane.f32.xlu0 %v1141
  %v1143 = vpop.xlane.xlu0 %1142
  %v1144 = vsel %vm1128, %v1140, 0.0
  %1145 = vadd.xlane.f32.xlu0 %v1144
  %v1146 = vpop.xlane.xlu0 %1145
  %v1147 = vrcp.pop %v1143
  %v1148 = vrcp.pop %v1146
  %v1149 = vmul.f32 %v1138, %v1147
  %v1150 = vmul.f32 %v1140, %v1148
  %v1151 = vpack.c.bf16 %v1149, %v1149
  %v1152 = vpack.c.bf16 %v1150, %v1150
  %1153 = vrot.lane.b32.xlu0 %v1084, 96
  %v1154 = vpop.permute.xlu0 %1153
  %v1157 = vsel %vm114, %v1151, 0
  %1159 = vmatpush.bf16.msra.mxu0 0
  %1160 = vmatpush.bf16.msra.mxu0 0
  %1161 = vmatpush.bf16.msra.mxu0 0
  %1162 = vmatpush.bf16.msra.mxu0 0
  %1163 = vmatpush.bf16.msra.mxu0 0
  %1164 = vmatpush.bf16.msra.mxu0 0
  %1165 = vmatpush.bf16.msra.mxu0 0
  %1166 = vmatpush.bf16.msra.mxu0 %v1154
  %1167 = vmatmul.bf16.gmra.mxu0 %v1157
  %v1168 = vpop.f32.mrf.mxu0
  %v1169 = vadd.f32 0.0, %v1168
  %v1170 = vpop.f32.mrf.mxu0
  %1171 = vdwg.mxu0
  %1172 = vrot.lane.b32.xlu0 %v1108, 96
  %v1173 = vpop.permute.xlu0 %1172
  %v1176 = vsel %vm114, %v1152, 0
  %1178 = vmatpush.bf16.msra.mxu0 0
  %1179 = vmatpush.bf16.msra.mxu0 0
  %1180 = vmatpush.bf16.msra.mxu0 0
  %1181 = vmatpush.bf16.msra.mxu0 0
  %1182 = vmatpush.bf16.msra.mxu0 0
  %1183 = vmatpush.bf16.msra.mxu0 0
  %1184 = vmatpush.bf16.msra.mxu0 0
  %1185 = vmatpush.bf16.msra.mxu0 %v1173
  %1186 = vmatmul.bf16.gmra.mxu0 %v1176
  %v1187 = vpop.f32.mrf.mxu0
  %v1188 = vadd.f32 0.0, %v1187
  %v1189 = vpop.f32.mrf.mxu0
  %1190 = vdwg.mxu0
  %v1193 = vrot.slane %v1188, 7
  %v1194 = vsel %vm924, %v1193, %v1169
  %vm1196 = vcmask 123904
  %1197 = vst.msk [vmem:[#allocation2] sm:$0x3] %vm1196, %v1194
  %v1199 = vunpack.c.l.b16 %v1074
  %v1200 = vpack.c.b16 %v1199, %v1199
  %1201 = vrot.lane.b32.xlu0 %v1200, 112
  %v1202 = vpop.permute.xlu0 %1201
  %1203 = vrot.lane.b32.xlu0 %v1084, 112
  %v1204 = vpop.permute.xlu0 %1203
  %v1206 = vsel %vm114, %v1202, 0
  %v1209 = vsel %vm114, %v1204, 0
  %1211 = vmatpush.bf16.xpose.msra.mxu0 0
  %1212 = vmatpush.bf16.xpose.msra.mxu0 0
  %1213 = vmatpush.bf16.xpose.msra.mxu0 0
  %1214 = vmatpush.bf16.xpose.msra.mxu0 0
  %1215 = vmatpush.bf16.xpose.msra.mxu0 0
  %1216 = vmatpush.bf16.xpose.msra.mxu0 0
  %1217 = vmatpush.bf16.xpose.msra.mxu0 0
  %1218 = vmatpush.bf16.xpose.msra.mxu0 %v1209
  %1219 = vmatmul.bf16.gmra.mxu0 %v1206
  %v1220 = vpop.f32.mrf.mxu0
  %v1221 = vadd.f32 0.0, %v1220
  %v1222 = vpop.f32.mrf.mxu0
  %1223 = vdwg.mxu0
  %v1225 = vunpack.c.l.b16 %v1075
  %v1226 = vpack.c.b16 %v1225, %v1225
  %1227 = vrot.lane.b32.xlu0 %v1226, 112
  %v1228 = vpop.permute.xlu0 %1227
  %1229 = vrot.lane.b32.xlu0 %v1108, 112
  %v1230 = vpop.permute.xlu0 %1229
  %v1232 = vsel %vm114, %v1228, 0
  %v1235 = vsel %vm114, %v1230, 0
  %1237 = vmatpush.bf16.xpose.msra.mxu0 0
  %1238 = vmatpush.bf16.xpose.msra.mxu0 0
  %1239 = vmatpush.bf16.xpose.msra.mxu0 0
  %1240 = vmatpush.bf16.xpose.msra.mxu0 0
  %1241 = vmatpush.bf16.xpose.msra.mxu0 0
  %1242 = vmatpush.bf16.xpose.msra.mxu0 0
  %1243 = vmatpush.bf16.xpose.msra.mxu0 0
  %1244 = vmatpush.bf16.xpose.msra.mxu0 %v1235
  %1245 = vmatmul.bf16.gmra.mxu0 %v1232
  %v1246 = vpop.f32.mrf.mxu0
  %v1247 = vadd.f32 0.0, %v1246
  %v1248 = vpop.f32.mrf.mxu0
  %1249 = vdwg.mxu0
  %v1250 = vsel %vm1128, %v1221, -inf
  %1251 = vmax.xlane.f32.xlu0 %v1250
  %v1252 = vpop.xlane.xlu0 %1251
  %v1253 = vsel %vm1128, %v1247, -inf
  %1254 = vmax.xlane.f32.xlu0 %v1253
  %v1255 = vpop.xlane.xlu0 %1254
  %v1256 = vsub.f32 %v1221, %v1252
  %v1257 = vsub.f32 %v1247, %v1255
  %v1258 = vmul.f32 %v1256, 1.442695
  %v1259 = vpow.pop %v1258
  %v1260 = vmul.f32 %v1257, 1.442695
  %v1261 = vpow.pop %v1260
  %v1262 = vsel %vm1128, %v1259, 0.0
  %1263 = vadd.xlane.f32.xlu0 %v1262
  %v1264 = vpop.xlane.xlu0 %1263
  %v1265 = vsel %vm1128, %v1261, 0.0
  %1266 = vadd.xlane.f32.xlu0 %v1265
  %v1267 = vpop.xlane.xlu0 %1266
  %v1268 = vrcp.pop %v1264
  %v1269 = vrcp.pop %v1267
  %v1270 = vmul.f32 %v1259, %v1268
  %v1271 = vmul.f32 %v1261, %v1269
  %v1272 = vpack.c.bf16 %v1270, %v1270
  %v1273 = vpack.c.bf16 %v1271, %v1271
  %1274 = vrot.lane.b32.xlu0 %v1084, 80
  %v1275 = vpop.permute.xlu0 %1274
  %v1278 = vsel %vm114, %v1272, 0
  %1280 = vmatpush.bf16.msra.mxu0 0
  %1281 = vmatpush.bf16.msra.mxu0 0
  %1282 = vmatpush.bf16.msra.mxu0 0
  %1283 = vmatpush.bf16.msra.mxu0 0
  %1284 = vmatpush.bf16.msra.mxu0 0
  %1285 = vmatpush.bf16.msra.mxu0 0
  %1286 = vmatpush.bf16.msra.mxu0 0
  %1287 = vmatpush.bf16.msra.mxu0 %v1275
  %1288 = vmatmul.bf16.gmra.mxu0 %v1278
  %v1289 = vpop.f32.mrf.mxu0
  %v1290 = vadd.f32 0.0, %v1289
  %v1291 = vpop.f32.mrf.mxu0
  %1292 = vdwg.mxu0
  %1293 = vrot.lane.b32.xlu0 %v1108, 80
  %v1294 = vpop.permute.xlu0 %1293
  %v1297 = vsel %vm114, %v1273, 0
  %1299 = vmatpush.bf16.msra.mxu0 0
  %1300 = vmatpush.bf16.msra.mxu0 0
  %1301 = vmatpush.bf16.msra.mxu0 0
  %1302 = vmatpush.bf16.msra.mxu0 0
  %1303 = vmatpush.bf16.msra.mxu0 0
  %1304 = vmatpush.bf16.msra.mxu0 0
  %1305 = vmatpush.bf16.msra.mxu0 0
  %1306 = vmatpush.bf16.msra.mxu0 %v1294
  %1307 = vmatmul.bf16.gmra.mxu0 %v1297
  %v1308 = vpop.f32.mrf.mxu0
  %v1309 = vadd.f32 0.0, %v1308
  %v1310 = vpop.f32.mrf.mxu0
  %1311 = vdwg.mxu0
  %v1314 = vrot.slane %v1309, 7
  %v1315 = vsel %vm924, %v1314, %v1290
  %1316 = vrot.lane.b32.xlu0 %v1315, 16
  %v1317 = vpop.permute.xlu0 %1316
  %vm1319 = vcmask 255104
  %1320 = vst.msk [vmem:[#allocation2] sm:$0x3] %vm1319, %v1317
  %v1321 = vld [vmem:[#allocation2] sm:$0x3]
  %v1322 = vld [vmem:[%s1 + $0x18] sm:$0xff]
  %v1323 = vld [vmem:[%s1 + $0x48] sm:$0xff]
  %v1324 = vld [vmem:[%s1 + $0x78] sm:$0xff]
  %v1325 = vld [vmem:[%s1 + $0xa8] sm:$0xff]
  %v1326 = vpack.c.bf16 %v1321, %v1321
  %v1327 = vpack.c.bf16 %v1323, %v1322
  %v1328 = vpack.c.bf16 %v1325, %v1324
  %v1329 = vld [vmem:[%s2 + $0x150] sm:$0x1]
  %v1330 = vperm.slane %v1329, 0
  %v1332 = vsel %vm77, %v1326, 0
  %1334 = vmatpush.bf16.msra.mxu0 0
  %1335 = vmatpush.bf16.msra.mxu0 0
  %1336 = vmatpush.bf16.msra.mxu0 0
  %1337 = vmatpush.bf16.msra.mxu0 0
  %1338 = vmatpush.bf16.msra.mxu0 0
  %1339 = vmatpush.bf16.msra.mxu0 0
  %1340 = vmatpush.bf16.msra.mxu0 %v1328
  %1341 = vmatpush.bf16.msra.mxu0 %v1327
  %1342 = vmatmul.bf16.gmra.mxu0 %v1332
  %v1343 = vpop.f32.mrf.mxu0
  %v1344 = vadd.f32 %v1330, %v1343
  %v1345 = vpop.f32.mrf.mxu0
  %1346 = vdwg.mxu0
  %v1348 = vrot.slane %v1344, 1
  %v1351 = vadd.f32 %v999, %v1344
  %v1352 = vadd.f32 %v1000, %v1348
  %v1353 = vld [vmem:[%s2 + $0x154] sm:$0x1]
  %v1354 = vld [vmem:[%s2 + $0x155] sm:$0x1]
  %v1357 = vrot.slane %v1352, 7
  %v1358 = vsel %vm924, %v1357, %v1351
  %v1360 = vsel %vm956, %v1358, 0.0
  %1361 = vadd.xlane.f32.xlu0 %v1360
  %v1362 = vpop.xlane.xlu0 %1361
  %v1363 = vmul.f32 %v1362, %v502
  %v1365 = vrot.slane %v1363, 1
  %v1368 = vsub.f32 %v1351, %v1363
  %v1369 = vsub.f32 %v1352, %v1365
  %v1370 = vmul.f32 %v1368, %v1368
  %v1371 = vmul.f32 %v1369, %v1369
  %v1374 = vrot.slane %v1371, 7
  %v1375 = vsel %vm924, %v1374, %v1370
  %v1377 = vsel %vm956, %v1375, 0.0
  %1378 = vadd.xlane.f32.xlu0 %v1377
  %v1379 = vpop.xlane.xlu0 %1378
  %v1380 = vmul.f32 %v1379, %v502
  %v1381 = vadd.f32 %v1380, 1e-05
  %v1382 = vrsqrt.pop %v1381
  %v1383 = vmul.f32 %v1382, %v1381
  %v1384 = vmul.f32 %v1383, %v1382
  %v1385 = vmul.f32 0.5, %v1384
  %v1386 = vsub.f32 1.5, %v1385
  %v1387 = vmul.f32 %v1382, %v1386
  %vm1388 = vweird.f32 %v1381
  %vm1389 = vweird.f32 %v1382
  %vm1390 = vmor %vm1388, %vm1389
  %v1391 = vsel %vm1390, %v1382, %v1387
  %v1393 = vrot.slane %v1391, 1
  %v1396 = vmul.f32 %v1368, %v1391
  %v1397 = vmul.f32 %v1369, %v1393
  %v1398 = vperm.slane %v1353, 0
  %v1399 = vmul.f32 %v1396, %v1398
  %v1400 = vmul.f32 %v1397, %v1398
  %v1401 = vperm.slane %v1354, 0
  %v1402 = vadd.f32 %v1399, %v1401
  %v1403 = vadd.f32 %v1400, %v1401
  %v1404 = vld [vmem:[%s1 + $0x18] sm:$0xff]
  %v1405 = vld [vmem:[%s1 + $0x20] sm:$0xff]
  %v1406 = vld [vmem:[%s1 + $0x48] sm:$0xff]
  %v1407 = vld [vmem:[%s1 + $0x50] sm:$0xff]
  %v1408 = vld [vmem:[%s1 + $0x78] sm:$0xff]
  %v1409 = vld [vmem:[%s1 + $0x80] sm:$0xff]
  %v1410 = vld [vmem:[%s1 + $0xa8] sm:$0xff]
  %v1411 = vld [vmem:[%s1 + $0xb0] sm:$0xff]
  %v1412 = vpack.c.bf16 %v1402, %v1402
  %v1413 = vpack.c.bf16 %v1403, %v1403
  %v1414 = vpack.c.bf16 %v1406, %v1404
  %v1415 = vpack.c.bf16 %v1407, %v1405
  %v1416 = vpack.c.bf16 %v1410, %v1408
  %v1417 = vpack.c.bf16 %v1411, %v1409
  %v1418 = vld [vmem:[%s3 + $0x3] sm:$0x1]
  %v1419 = vperm.slane %v1418, 0
  %v1422 = vunpack.c.l.b16 %v1412
  %v1423 = vunpack.c.l.b16 %v1413
  %v1424 = vrot.slane %v1423, 7
  %v1425 = vsel %vm924, %v1424, %v1422
  %v1426 = vpack.c.b16 %v1425, %v1425
  %1431 = vrot.lane.b32.xlu0 %v1414, 96
  %v1432 = vpop.permute.xlu0 %1431
  %1433 = vrot.lane.b32.xlu0 %v1415, 96
  %v1434 = vpop.permute.xlu0 %1433
  %1435 = vrot.lane.b32.xlu0 %v1416, 96
  %v1436 = vpop.permute.xlu0 %1435
  %1437 = vrot.lane.b32.xlu0 %v1417, 96
  %v1438 = vpop.permute.xlu0 %1437
  %vm1439 = vcmask 785408
  %v1440 = vsel %vm1439, %v1432, %v1434
  %v1441 = vsel %vm1439, %v1436, %v1438
  %v1445 = vsel %vm77, %v1426, 0
  %1447 = vmatpush.bf16.msra.mxu0 0
  %1448 = vmatpush.bf16.msra.mxu0 0
  %1449 = vmatpush.bf16.msra.mxu0 0
  %1450 = vmatpush.bf16.msra.mxu0 0
  %1451 = vmatpush.bf16.msra.mxu0 0
  %1452 = vmatpush.bf16.msra.mxu0 0
  %1453 = vmatpush.bf16.msra.mxu0 %v1441
  %1454 = vmatpush.bf16.msra.mxu0 %v1440
  %1455 = vmatmul.bf16.gmra.mxu0 %v1445
  %v1456 = vpop.f32.mrf.mxu0
  %v1457 = vadd.f32 %v1419, %v1456
  %v1458 = vpop.f32.mrf.mxu0
  %1459 = vdwg.mxu0
  %v1460 = vmul.f32 %v1457, 0.5
  %v1461 = vmul.f32 %v1457, 0.044715
  %v1462 = vmul.f32 %v1461, %v1457
  %v1463 = vmul.f32 %v1462, %v1457
  %v1464 = vadd.f32 %v1457, %v1463
  %v1465 = vmul.f32 %v1464, 0.7978846
  %v1466 = vtanh.pop %v1465
  %v1467 = vadd.f32 %v1466, 1.0
  %v1468 = vmul.f32 %v1460, %v1467
  %v1469 = vld [vmem:[%s2 + $0xc1] sm:$0xff]
  %v1470 = vld [vmem:[%s2 + $0xc9] sm:$0xff]
  %v1471 = vld [vmem:[%s2 + $0xd1] sm:$0xff]
  %v1472 = vld [vmem:[%s2 + $0xd9] sm:$0xff]
  %v1473 = vld [vmem:[%s2 + $0xe1] sm:$0xff]
  %v1474 = vld [vmem:[%s2 + $0xe9] sm:$0xff]
  %v1475 = vld [vmem:[%s2 + $0xf1] sm:$0xff]
  %v1476 = vld [vmem:[%s2 + $0xf9] sm:$0xff]
  %v1477 = vld [vmem:[%s2 + $0x101] sm:$0xff]
  %v1478 = vld [vmem:[%s2 + $0x109] sm:$0xff]
  %v1479 = vld [vmem:[%s2 + $0x111] sm:$0xff]
  %v1480 = vld [vmem:[%s2 + $0x119] sm:$0xff]
  %v1481 = vld [vmem:[%s2 + $0x121] sm:$0xff]
  %v1482 = vld [vmem:[%s2 + $0x129] sm:$0xff]
  %v1483 = vld [vmem:[%s2 + $0x131] sm:$0xff]
  %v1484 = vld [vmem:[%s2 + $0x139] sm:$0xff]
  %v1485 = vpack.c.bf16 %v1468, %v1468
  %v1486 = vpack.c.bf16 %v1470, %v1469
  %v1487 = vpack.c.bf16 %v1472, %v1471
  %v1488 = vpack.c.bf16 %v1474, %v1473
  %v1489 = vpack.c.bf16 %v1476, %v1475
  %v1490 = vpack.c.bf16 %v1478, %v1477
  %v1491 = vpack.c.bf16 %v1480, %v1479
  %v1492 = vpack.c.bf16 %v1482, %v1481
  %v1493 = vpack.c.bf16 %v1484, %v1483
  %v1494 = vld [vmem:[%s2 + $0x151] sm:$0x1]
  %v1495 = vperm.slane %v1494, 0
  %1496 = vmatpush.bf16.msra.mxu0 %v1493
  %1497 = vmatpush.bf16.msra.mxu0 %v1492
  %1498 = vmatpush.bf16.msra.mxu0 %v1491
  %1499 = vmatpush.bf16.msra.mxu0 %v1490
  %1500 = vmatpush.bf16.msra.mxu0 %v1489
  %1501 = vmatpush.bf16.msra.mxu0 %v1488
  %1502 = vmatpush.bf16.msra.mxu0 %v1487
  %1503 = vmatpush.bf16.msra.mxu0 %v1486
  %1504 = vmatmul.bf16.gmra.mxu0 %v1485
  %v1505 = vpop.f32.mrf.mxu0
  %v1506 = vadd.f32 %v1495, %v1505
  %v1507 = vpop.f32.mrf.mxu0
  %1508 = vdwg.mxu0
  %v1510 = vrot.slane %v1506, 1
  %v1513 = vadd.f32 %v1402, %v1506
  %v1514 = vadd.f32 %v1403, %v1510
  %v1515 = vld [vmem:[%s2 + $0x156] sm:$0x1]
  %v1516 = vld [vmem:[%s2 + $0x157] sm:$0x1]
  %v1519 = vrot.slane %v1514, 7
  %v1520 = vsel %vm924, %v1519, %v1513
  %v1522 = vsel %vm956, %v1520, 0.0
  %1523 = vadd.xlane.f32.xlu0 %v1522
  %v1524 = vpop.xlane.xlu0 %1523
  %v1525 = vmul.f32 %v1524, %v502
  %v1527 = vrot.slane %v1525, 1
  %v1530 = vsub.f32 %v1513, %v1525
  %v1531 = vsub.f32 %v1514, %v1527
  %v1532 = vmul.f32 %v1530, %v1530
  %v1533 = vmul.f32 %v1531, %v1531
  %v1536 = vrot.slane %v1533, 7
  %v1537 = vsel %vm924, %v1536, %v1532
  %v1539 = vsel %vm956, %v1537, 0.0
  %1540 = vadd.xlane.f32.xlu0 %v1539
  %v1541 = vpop.xlane.xlu0 %1540
  %v1542 = vmul.f32 %v1541, %v502
  %v1543 = vadd.f32 %v1542, 1e-05
  %v1544 = vrsqrt.pop %v1543
  %v1545 = vmul.f32 %v1544, %v1543
  %v1546 = vmul.f32 %v1545, %v1544
  %v1547 = vmul.f32 0.5, %v1546
  %v1548 = vsub.f32 1.5, %v1547
  %v1549 = vmul.f32 %v1544, %v1548
  %vm1550 = vweird.f32 %v1543
  %vm1551 = vweird.f32 %v1544
  %vm1552 = vmor %vm1550, %vm1551
  %v1553 = vsel %vm1552, %v1544, %v1549
  %v1555 = vrot.slane %v1553, 1
  %v1558 = vmul.f32 %v1530, %v1553
  %v1559 = vmul.f32 %v1531, %v1555
  %v1560 = vperm.slane %v1515, 0
  %v1561 = vmul.f32 %v1558, %v1560
  %v1562 = vmul.f32 %v1559, %v1560
  %v1563 = vperm.slane %v1516, 0
  %v1564 = vadd.f32 %v1561, %v1563
  %v1565 = vadd.f32 %v1562, %v1563
  %v1566 = vld [vmem:[%s2 + $0x158] sm:$0x1]
  %v1567 = vld [vmem:[%s2 + $0x159] sm:$0x1]
  %v1570 = vrot.slane %v1565, 7
  %v1571 = vsel %vm924, %v1570, %v1564
  %v1573 = vsel %vm956, %v1571, 0.0
  %1574 = vadd.xlane.f32.xlu0 %v1573
  %v1575 = vpop.xlane.xlu0 %1574
  %v1576 = vmul.f32 %v1575, %v502
  %v1578 = vrot.slane %v1576, 1
  %v1581 = vsub.f32 %v1564, %v1576
  %v1582 = vsub.f32 %v1565, %v1578
  %v1583 = vmul.f32 %v1581, %v1581
  %v1584 = vmul.f32 %v1582, %v1582
  %v1587 = vrot.slane %v1584, 7
  %v1588 = vsel %vm924, %v1587, %v1583
  %v1590 = vsel %vm956, %v1588, 0.0
  %1591 = vadd.xlane.f32.xlu0 %v1590
  %v1592 = vpop.xlane.xlu0 %1591
  %v1593 = vmul.f32 %v1592, %v502
  %v1594 = vadd.f32 %v1593, 1e-05
  %v1595 = vrsqrt.pop %v1594
  %v1596 = vmul.f32 %v1595, %v1594
  %v1597 = vmul.f32 %v1596, %v1595
  %v1598 = vmul.f32 0.5, %v1597
  %v1599 = vsub.f32 1.5, %v1598
  %v1600 = vmul.f32 %v1595, %v1599
  %vm1601 = vweird.f32 %v1594
  %vm1602 = vweird.f32 %v1595
  %vm1603 = vmor %vm1601, %vm1602
  %v1604 = vsel %vm1603, %v1595, %v1600
  %v1606 = vrot.slane %v1604, 1
  %v1609 = vmul.f32 %v1581, %v1604
  %v1610 = vmul.f32 %v1582, %v1606
  %v1611 = vperm.slane %v1566, 0
  %v1612 = vmul.f32 %v1609, %v1611
  %v1613 = vmul.f32 %v1610, %v1611
  %v1614 = vperm.slane %v1567, 0
  %v1615 = vadd.f32 %v1612, %v1614
  %v1616 = vadd.f32 %v1613, %v1614
  %v1617 = vld [vmem:[%s1 + $0x28] sm:$0xff]
  %v1618 = vld [vmem:[%s1 + $0x58] sm:$0xff]
  %v1619 = vld [vmem:[%s1 + $0x88] sm:$0xff]
  %v1620 = vld [vmem:[%s1 + $0xb8] sm:$0xff]
  %v1621 = vpack.c.bf16 %v1615, %v1615
  %v1622 = vpack.c.bf16 %v1616, %v1616
  %v1623 = vpack.c.bf16 %v1618, %v1617
  %v1624 = vpack.c.bf16 %v1620, %v1619
  %v1625 = vld [vmem:[%s3 + $0x4] sm:$0x1]
  %v1626 = vperm.slane %v1625, 0
  %v1629 = vunpack.c.l.b16 %v1621
  %v1630 = vunpack.c.l.b16 %v1622
  %v1631 = vrot.slane %v1630, 7
  %v1632 = vsel %vm924, %v1631, %v1629
  %v1633 = vpack.c.b16 %v1632, %v1632
  %1636 = vrot.lane.b32.xlu0 %v1623, 96
  %v1637 = vpop.permute.xlu0 %1636
  %1638 = vrot.lane.b32.xlu0 %v1624, 96
  %v1639 = vpop.permute.xlu0 %1638
  %v1643 = vsel %vm77, %v1633, 0
  %1645 = vmatpush.bf16.msra.mxu0 0
  %1646 = vmatpush.bf16.msra.mxu0 0
  %1647 = vmatpush.bf16.msra.mxu0 0
  %1648 = vmatpush.bf16.msra.mxu0 0
  %1649 = vmatpush.bf16.msra.mxu0 0
  %1650 = vmatpush.bf16.msra.mxu0 0
  %1651 = vmatpush.bf16.msra.mxu0 %v1639
  %1652 = vmatpush.bf16.msra.mxu0 %v1637
  %1653 = vmatmul.bf16.gmra.mxu0 %v1643
  %v1654 = vpop.f32.mrf.mxu0
  %v1655 = vadd.f32 %v1626, %v1654
  %v1656 = vpop.f32.mrf.mxu0
  %1657 = vdwg.mxu0
  %v1658 = vld [vmem:[%s2 + $0x15a] sm:$0x1]
  %v1659 = vperm.slane %v1658, 0
  %1662 = vmatpush.bf16.msra.mxu0 0
  %1663 = vmatpush.bf16.msra.mxu0 0
  %1664 = vmatpush.bf16.msra.mxu0 0
  %1665 = vmatpush.bf16.msra.mxu0 0
  %1666 = vmatpush.bf16.msra.mxu0 0
  %1667 = vmatpush.bf16.msra.mxu0 0
  %1668 = vmatpush.bf16.msra.mxu0 %v1438
  %1669 = vmatpush.bf16.msra.mxu0 %v1434
  %1670 = vmatmul.bf16.gmra.mxu0 %v1643
  %v1671 = vpop.f32.mrf.mxu0
  %v1672 = vadd.f32 %v1659, %v1671
  %v1673 = vpop.f32.mrf.mxu0
  %1674 = vdwg.mxu0
  %v1675 = vmul.f32 %v1672, 0.5
  %v1676 = vmul.f32 %v1672, 0.044715
  %v1677 = vmul.f32 %v1676, %v1672
  %v1678 = vmul.f32 %v1677, %v1672
  %v1679 = vadd.f32 %v1672, %v1678
  %v1680 = vmul.f32 %v1679, 0.7978846
  %v1681 = vtanh.pop %v1680
  %v1682 = vadd.f32 %v1681, 1.0
  %v1683 = vmul.f32 %v1675, %v1682
  %v1684 = vpack.c.bf16 %v1683, %v1683
  %v1685 = vld [vmem:[%s2 + $0x15b] sm:$0x1]
  %v1686 = vperm.slane %v1685, 0
  %1687 = vrot.lane.b32.xlu0 %v1415, 64
  %v1688 = vpop.permute.xlu0 %1687
  %1689 = vrot.lane.b32.xlu0 %v1417, 64
  %v1690 = vpop.permute.xlu0 %1689
  %v1694 = vsel %vm77, %v1684, 0
  %1696 = vmatpush.bf16.msra.mxu0 0
  %1697 = vmatpush.bf16.msra.mxu0 0
  %1698 = vmatpush.bf16.msra.mxu0 0
  %1699 = vmatpush.bf16.msra.mxu0 0
  %1700 = vmatpush.bf16.msra.mxu0 0
  %1701 = vmatpush.bf16.msra.mxu0 0
  %1702 = vmatpush.bf16.msra.mxu0 %v1690
  %1703 = vmatpush.bf16.msra.mxu0 %v1688
  %1704 = vmatmul.bf16.gmra.mxu0 %v1694
  %v1705 = vpop.f32.mrf.mxu0
  %v1706 = vadd.f32 %v1686, %v1705
  %v1707 = vpop.f32.mrf.mxu0
  %1708 = vdwg.mxu0
  %v1709 = vmul.f32 %v1706, 0.5
  %v1710 = vmul.f32 %v1706, 0.044715
  %v1711 = vmul.f32 %v1710, %v1706
  %v1712 = vmul.f32 %v1711, %v1706
  %v1713 = vadd.f32 %v1706, %v1712
  %v1714 = vmul.f32 %v1713, 0.7978846
  %v1715 = vtanh.pop %v1714
  %v1716 = vadd.f32 %v1715, 1.0
  %v1717 = vmul.f32 %v1709, %v1716
  %v1718 = vpack.c.bf16 %v1717, %v1717
  %v1719 = vld [vmem:[%s2 + $0x15c] sm:$0x1]
  %v1720 = vperm.slane %v1719, 0
  %1721 = vrot.lane.b32.xlu0 %v1415, 32
  %v1722 = vpop.permute.xlu0 %1721
  %1723 = vrot.lane.b32.xlu0 %v1417, 32
  %v1724 = vpop.permute.xlu0 %1723
  %v1728 = vsel %vm77, %v1718, 0
  %1730 = vmatpush.bf16.msra.mxu0 0
  %1731 = vmatpush.bf16.msra.mxu0 0
  %1732 = vmatpush.bf16.msra.mxu0 0
  %1733 = vmatpush.bf16.msra.mxu0 0
  %1734 = vmatpush.bf16.msra.mxu0 0
  %1735 = vmatpush.bf16.msra.mxu0 0
  %1736 = vmatpush.bf16.msra.mxu0 %v1724
  %1737 = vmatpush.bf16.msra.mxu0 %v1722
  %1738 = vmatmul.bf16.gmra.mxu0 %v1728
  %v1739 = vpop.f32.mrf.mxu0
  %v1740 = vadd.f32 %v1720, %v1739
  %v1741 = vpop.f32.mrf.mxu0
  %1742 = vdwg.mxu0
  %v1743 = vmul.f32 %v1740, 0.5
  %v1744 = vmul.f32 %v1740, 0.044715
  %v1745 = vmul.f32 %v1744, %v1740
  %v1746 = vmul.f32 %v1745, %v1740
  %v1747 = vadd.f32 %v1740, %v1746
  %v1748 = vmul.f32 %v1747, 0.7978846
  %v1749 = vtanh.pop %v1748
  %v1750 = vadd.f32 %v1749, 1.0
  %v1751 = vmul.f32 %v1743, %v1750
  %v1752 = vpack.c.bf16 %v1751, %v1751
  %v1753 = vld [vmem:[%s2 + $0x15d] sm:$0x1]
  %v1754 = vperm.slane %v1753, 0
  %v1756 = vsel %vm77, %v1752, 0
  %1758 = vmatpush.bf16.msra.mxu0 0
  %1759 = vmatpush.bf16.msra.mxu0 0
  %1760 = vmatpush.bf16.msra.mxu0 0
  %1761 = vmatpush.bf16.msra.mxu0 0
  %1762 = vmatpush.bf16.msra.mxu0 0
  %1763 = vmatpush.bf16.msra.mxu0 0
  %1764 = vmatpush.bf16.msra.mxu0 %v1624
  %1765 = vmatpush.bf16.msra.mxu0 %v1623
  %1766 = vmatmul.bf16.gmra.mxu0 %v1756
  %v1767 = vpop.f32.mrf.mxu0
  %v1768 = vadd.f32 %v1754, %v1767
  %v1769 = vpop.f32.mrf.mxu0
  %1770 = vdwg.mxu0
  %v1771 = vmul.f32 %v1768, 0.5
  %v1772 = vmul.f32 %v1768, 0.044715
  %v1773 = vmul.f32 %v1772, %v1768
  %v1774 = vmul.f32 %v1773, %v1768
  %v1775 = vadd.f32 %v1768, %v1774
  %v1776 = vmul.f32 %v1775, 0.7978846
  %v1777 = vtanh.pop %v1776
  %v1778 = vadd.f32 %v1777, 1.0
  %v1779 = vmul.f32 %v1771, %v1778
  %v1780 = vpack.c.bf16 %v1779, %v1779
  %v1781 = vld [vmem:[%s3 + $0x5] sm:$0x1]
  %v1782 = vperm.slane %v1781, 0
  %1783 = vrot.lane.b32.xlu0 %v1623, 94
  %v1784 = vpop.permute.xlu0 %1783
  %1785 = vrot.lane.b32.xlu0 %v1624, 94
  %v1786 = vpop.permute.xlu0 %1785
  %v1790 = vsel %vm77, %v1780, 0
  %1792 = vmatpush.bf16.msra.mxu0 0
  %1793 = vmatpush.bf16.msra.mxu0 0
  %1794 = vmatpush.bf16.msra.mxu0 0
  %1795 = vmatpush.bf16.msra.mxu0 0
  %1796 = vmatpush.bf16.msra.mxu0 0
  %1797 = vmatpush.bf16.msra.mxu0 0
  %1798 = vmatpush.bf16.msra.mxu0 %v1786
  %1799 = vmatpush.bf16.msra.mxu0 %v1784
  %1800 = vmatmul.bf16.gmra.mxu0 %v1790
  %v1801 = vpop.f32.mrf.mxu0
  %v1802 = vadd.f32 %v1782, %v1801
  %v1803 = vpop.f32.mrf.mxu0
  %1804 = vdwg.mxu0
  %v1805 = vxor.u32 %v1802, 2147483648
  %v1806 = vmul.f32 %v1805, 1.442695
  %v1807 = vpow.pop %v1806
  %v1808 = vadd.f32 %v1807, 1.0
  %v1809 = vrcp.pop %v1808
  %v1810 = vmul.f32 %v1808, %v1809
  %v1811 = vsub.f32 1.0, %v1810
  %v1812 = vmul.f32 %v1809, %v1811
  %v1813 = vadd.f32 %v1809, %v1812
  %vm1814 = vweird.f32 %v1808
  %vm1815 = vweird.f32 %v1809
  %vm1816 = vmor %vm1814, %vm1815
  %v1817 = vsel %vm1816, %v1809, %v1813
  %v1818 = vand.u32 2147483647, %v1808
  %vm1819 = vcmp.eq.f32.partialorder %v1818, 8.507059e+37
  %v1820 = vand.u32 %v1808, 2147483648
  %v1821 = vor.u32 1.1754944e-38, %v1820
  %v1822 = vsel %vm1819, %v1821, %v1817
  %v1823 = vmul.f32 1.0, %v1822
  %v1824 = vld [vmem:[%s2 + $0x141] sm:$0xf]
  %vm1825 = vcmask 31744
  %v1827 = vsel %vm1825, %v1823, 0
  %vm1829 = vcmask 1043456
  %v1831 = vsel %vm1829, %v1824, 0
  %1833 = vmatpush.msra.mxu0 0.0
  %1834 = vmatpush.msra.mxu0 0.0
  %1835 = vmatpush.msra.mxu0 0.0
  %1836 = vmatpush.msra.mxu0 0.0
  %1837 = vmatpush.msra.mxu0 0.0
  %1838 = vmatpush.msra.mxu0 0.0
  %1839 = vmatpush.msra.mxu0 0.0
  %1840 = vmatpush.msra.mxu0 0.0
  %1841 = vmatpush.msra.mxu0 0.0
  %1842 = vmatpush.msra.mxu0 0.0
  %1843 = vmatpush.msra.mxu0 0.0
  %1844 = vmatpush.msra.mxu0 0.0
  %1845 = vmatpush.msra.mxu0 0.0
  %1846 = vmatpush.msra.mxu0 0.0
  %1847 = vmatpush.msra.mxu0 0.0
  %1848 = vmatpush.msra.mxu0 %v1831
  %1849 = vmatmul.f32.gmra.mxu0 %v1827
  %v1850 = vpop.f32.mrf.mxu0
  %v1851 = vadd.f32 0.0, %v1850
  %1852 = vdwg.mxu0
  %1853 = vst [vmem:[%s4] sm:$0x3] 0.0
  %vm1854 = vcmask 9216
  %1855 = vst.msk [vmem:[%s4] sm:$0x3] %vm1854, %v1655
  %1856 = vrot.lane.b32.xlu0 %v1823, 2
  %v1857 = vpop.permute.xlu0 %1856
  %vm1859 = vcmask 42000
  %1860 = vst.msk [vmem:[%s4] sm:$0x3] %vm1859, %v1857
  %1862 = vrot.lane.b32.xlu0 %v1851, 6
  %v1863 = vpop.permute.xlu0 %1862
  %vm1865 = vcmask 74800
  %1866 = vst.msk [vmem:[%s4] sm:$0x3] %vm1865, %v1863
  // Predicated region
  $region18: #{_lambda_.1} parent=0 // pred_check
    _
  $region19: #{_lambda_.1} parent=0 // pred_check_branch
    %1868 = sbr.rel (0) target = $region21
  $region20: #{_lambda_.1} parent=0 // pred_region
    _
  $region21: #{_lambda_.1} parent=0 // pred_fallthru
    _
  // Predicated region
  $region22: #{_lambda_.1} parent=0 // pred_check
    _
  $region23: #{_lambda_.1} parent=0 // pred_check_branch
    %1870 = sbr.rel (0) target = $region25
  $region24: #{_lambda_.1} parent=0 // pred_region
    _
  $region25: #{_lambda_.1} parent=0 // pred_fallthru
    _

</llo_original>
